<compile_context>
chip_gen: v7x
topology: tpu7x:2x2x1
jax: 0.10.0
libtpu: 0.0.40
codegen_flags: <defaults>
</compile_context>

<pallas_src>
import functools

import numpy as np
import jax
import jax.numpy as jnp
from jax import lax
from jax.experimental import pallas as pl
from jax.experimental.pallas import tpu as pltpu


def _round_up(x, m):
    return ((x + m - 1) // m) * m


# ----------------------------------------------------------------------------
# Fused kernel: L-layer GRU (wavefront over layers) + Linear(H, O) head
# ----------------------------------------------------------------------------
def _decoder_rnn_kernel(x_ref, h0_ref, p_ref, out_ref, hs_ref,
                        *, T, Bp, H, L, O, GB, RW, RB):
    # x_ref : (T*Bp, 1)       layer-0 input sequence (batch padded to Bp)
    # h0_ref: (L*Bp, H)       initial hidden states, layer-major
    # p_ref : packed params   rows [0:L*H]      -> W_big (L*H, (2L-1)*GB)
    #                         rows [RW:RW+L]    -> per-layer biases (+ wih_0)
    #                         rows [RW+RB:...]  -> Linear head [W_out; b_out]
    # out_ref: (T*Bp, O)      hs_ref: VMEM scratch (T*Bp, H)
    G3 = 3 * H
    C = (2 * L - 1) * GB          # L gh blocks + (L-1) shifted gi blocks

    # ---- hoisted, static parameter slices (single packed array, 1 DMA) ----
    w_big = p_ref[0:L * H, 0:C]                                 # (L*H, C)
    wih0 = p_ref[RW:RW + 1, 2 * GB:2 * GB + G3]                 # (1, 3H)
    bf_row = [p_ref[RW + l:RW + l + 1, 0:G3] for l in range(L)]  # fused b (1,3H)
    bhn_b = [jnp.broadcast_to(p_ref[RW + l:RW + l + 1, GB:GB + H], (Bp, H))
             for l in range(L)]                                  # hoisted bcast
    bf_b = [None] + [jnp.broadcast_to(bf_row[l], (Bp, G3)) for l in range(1, L)]
    w_out = p_ref[RW + RB:RW + RB + H, 0:O]                      # (H, O)
    b_out = p_ref[RW + RB + H:RW + RB + H + 1, 0:O]              # (1, O)

    # ---- hoisted layer-0 input projection for the whole sequence ----
    # input_size == 1 -> outer product on the VPU (no MXU needed), fused bias.
    gi_x = x_ref[...] * wih0 + bf_row[0]                         # (T*Bp, 3H)

    # ---- wavefront recurrence: superstep s advances layer l at t = s - l ----
    h = [h0_ref[l * Bp:(l + 1) * Bp, :] for l in range(L)]       # each (Bp, H)

    for s in range(T + L - 1):                                   # static unroll
        h_stk = h[0] if L == 1 else jnp.concatenate(h, axis=1)   # (Bp, L*H)
        # One matmul per superstep: all layers' gh AND next-layer gi.
        big = jnp.dot(h_stk, w_big, preferred_element_type=jnp.float32)

        new_h = list(h)
        for l in range(L):
            t = s - l
            if t < 0 or t >= T:          # layer inactive at this superstep
                continue
            gh = big[:, l * GB:l * GB + G3]                      # (Bp, 3H)
            if l == 0:
                gi = gi_x[t * Bp:(t + 1) * Bp, :]                # aligned slice
            else:
                # gi_l = h_{l-1}(t) @ Wih_l  (came out of the same matmul)
                gi = big[:, (L + l - 1) * GB:(L + l - 1) * GB + G3] + bf_b[l]
            r = jax.nn.sigmoid(gi[:, :H] + gh[:, :H])
            z = jax.nn.sigmoid(gi[:, H:2 * H] + gh[:, H:2 * H])
            n = jnp.tanh(gi[:, 2 * H:] + r * (gh[:, 2 * H:] + bhn_b[l]))
            h_new = (1.0 - z) * n + z * h[l]
            new_h[l] = h_new
            if l == L - 1:
                # Only the last layer's states are kept; Bp=8 -> unmasked vst.
                hs_ref[t * Bp:(t + 1) * Bp, :] = h_new
        h = new_h

    # ---- Linear(H, O) head: ONE matmul + ONE store ----
    cur = hs_ref[...]                                            # (T*Bp, H)
    out_ref[...] = jnp.dot(cur, w_out,
                           preferred_element_type=jnp.float32) + b_out


# ----------------------------------------------------------------------------
# One-time parameter packing (all per-call folding moved here)
# ----------------------------------------------------------------------------
def pack_decoder_params(params):
    layers = params["layers"]
    L = len(layers)
    I, G3 = layers[0]["wih"].shape
    H = G3 // 3
    O = params["wout"].shape[1]
    assert I == 1, "Decoder_RNN fixes nn.GRU input_size=1"

    GB = _round_up(G3, 128)          # lane-aligned per-layer gate block stride
    C = (2 * L - 1) * GB
    RW = _round_up(L * H, 8)
    RB = _round_up(L, 8)
    RH = _round_up(H + 1, 8)
    PW = _round_up(max(C, 3 * GB, O), 128)

    P = np.zeros((RW + RB + RH, PW), np.float32)
    for l, lp in enumerate(layers):
        whh = np.asarray(lp["whh"], np.float32)                  # (H, 3H)
        bih = np.asarray(lp["bih"], np.float32).reshape(-1)
        bhh = np.asarray(lp["bhh"], np.float32).reshape(-1)
        # block-diagonal recurrent weights (gh blocks)
        P[l * H:(l + 1) * H, l * GB:l * GB + G3] = whh
        # shifted input-projection weights for layers > 0 (gi blocks)
        if l > 0:
            wih = np.asarray(lp["wih"], np.float32)              # (H, 3H)
            P[(l - 1) * H:l * H, (L + l - 1) * GB:(L + l - 1) * GB + G3] = wih
        # fused bias: b_ih + b_hh on r,z gates; b_hh(n) kept separately
        bf = bih.copy()
        bf[:2 * H] += bhh[:2 * H]
        P[RW + l, 0:G3] = bf
        P[RW + l, GB:GB + H] = bhh[2 * H:]
    # layer-0 input weights (input_size == 1 -> a single row)
    P[RW, 2 * GB:2 * GB + G3] = np.asarray(layers[0]["wih"],
                                           np.float32).reshape(-1)
    # Linear head
    P[RW + RB:RW + RB + H, 0:O] = np.asarray(params["wout"], np.float32)
    P[RW + RB + H, 0:O] = np.asarray(params["bout"], np.float32).reshape(-1)

    return {"params": jnp.asarray(P), "H": H, "L": L, "O": O,
            "GB": GB, "RW": RW, "RB": RB}


# ----------------------------------------------------------------------------
# Wrapper (pads batch to one sublane tile, single fused pallas_call)
# ----------------------------------------------------------------------------
def decoder_rnn_forward(x, hn, packed):
    """x: (T, B, 1), hn: (L, B, H) -> (T, B, O)  (matches Decoder_RNN)."""
    T, B, I = x.shape
    L, _, H = hn.shape
    O = packed["O"]
    assert I == 1 and H == packed["H"] and L == packed["L"]

    Bp = _round_up(B, 8)                     # pad batch to one f32 sublane tile
    xp = jnp.pad(x.astype(jnp.float32), ((0, 0), (0, Bp - B), (0, 0)))
    hp = jnp.pad(hn.astype(jnp.float32), ((0, 0), (0, Bp - B), (0, 0)))
    x2d = xp.reshape(T * Bp, 1)
    h2d = hp.reshape(L * Bp, H)

    kernel = functools.partial(
        _decoder_rnn_kernel, T=T, Bp=Bp, H=H, L=L, O=O,
        GB=packed["GB"], RW=packed["RW"], RB=packed["RB"])
    vmem = pl.BlockSpec(memory_space=pltpu.MemorySpace.VMEM)

    out2d = pl.pallas_call(
        kernel,
        out_shape=jax.ShapeDtypeStruct((T * Bp, O), jnp.float32),
        in_specs=[vmem, vmem, vmem],
        out_specs=vmem,
        scratch_shapes=[pltpu.VMEM((T * Bp, H), jnp.float32)],
    )(x2d, h2d, packed["params"])
    return out2d.reshape(T, Bp, O)[:, :B, :]


# ----------------------------------------------------------------------------
# Pure-JAX reference (PyTorch GRU semantics, unfused biases) for validation
# ----------------------------------------------------------------------------
def _gru_layer_ref(xs, h0, p):
    H = h0.shape[-1]

    def step(h, x_t):
        gi = jnp.dot(x_t, p["wih"]) + p["bih"]
        gh = jnp.dot(h, p["whh"]) + p["bhh"]
        r = jax.nn.sigmoid(gi[:, :H] + gh[:, :H])
        z = jax.nn.sigmoid(gi[:, H:2 * H] + gh[:, H:2 * H])
        n = jnp.tanh(gi[:, 2 * H:] + r * gh[:, 2 * H:])
        h_new = (1.0 - z) * n + z * h
        return h_new, h_new

    _, hs = lax.scan(step, h0, xs)
    return hs


def decoder_rnn_ref(x, hn, params):
    cur = x
    for l, lp in enumerate(params["layers"]):
        cur = _gru_layer_ref(cur, hn[l], lp)
    return jnp.einsum("tbh,ho->tbo", cur, params["wout"]) + params["bout"]


# ----------------------------------------------------------------------------
# Deterministic parameter init (PyTorch-style uniform(-1/sqrt(H), 1/sqrt(H)))
# ----------------------------------------------------------------------------
def init_decoder_params(key, hidden_size, output_size, num_layer, input_size=1):
    k = 1.0 / jnp.sqrt(jnp.float32(hidden_size))
    keys = jax.random.split(key, 4 * num_layer + 2)
    layers = []
    in_size = input_size
    idx = 0
    for _ in range(num_layer):
        layers.append({
            # stored pre-transposed: (I, 3H) / (H, 3H), gate order [r | z | n]
            "wih": jax.random.uniform(keys[idx + 0], (in_size, 3 * hidden_size),
                                      jnp.float32, -k, k),
            "whh": jax.random.uniform(keys[idx + 1], (hidden_size, 3 * hidden_size),
                                      jnp.float32, -k, k),
            "bih": jax.random.uniform(keys[idx + 2], (1, 3 * hidden_size),
                                      jnp.float32, -k, k),
            "bhh": jax.random.uniform(keys[idx + 3], (1, 3 * hidden_size),
                                      jnp.float32, -k, k),
        })
        idx += 4
        in_size = hidden_size
    return {
        "layers": layers,
        "wout": jax.random.uniform(keys[idx], (hidden_size, output_size),
                                   jnp.float32, -k, k),
        "bout": jax.random.uniform(keys[idx + 1], (1, output_size),
                                   jnp.float32, -k, k),
    }


if __name__ == "__main__":
    SEQ, BATCH, HIDDEN, OUTPUT, NUM_LAYER = 8, 2, 32, 1, 2
    INPUT = 1  # Decoder_RNN fixes nn.GRU input_size=1

    root = jax.random.PRNGKey(0)
    k_p, k_x, k_h = jax.random.split(root, 3)

    params = init_decoder_params(k_p, HIDDEN, OUTPUT, NUM_LAYER, INPUT)
    packed = pack_decoder_params(params)          # one-time packing / folding

    x = jax.random.normal(k_x, (SEQ, BATCH, INPUT), jnp.float32)
    hn = jax.random.normal(k_h, (NUM_LAYER, BATCH, HIDDEN), jnp.float32)

    fwd = jax.jit(lambda xx, hh: decoder_rnn_forward(xx, hh, packed))
    out = jax.block_until_ready(fwd(x, hn))
    ref = jax.block_until_ready(decoder_rnn_ref(x, hn, params))

    assert out.shape == (SEQ, BATCH, OUTPUT), out.shape
    err = float(jnp.max(jnp.abs(out - ref)))
    assert err < 1e-4, err

    print("KERNEL_OK")
</pallas_src>

<mosaic_0001>
module attributes {stable_mosaic.version = 11 : i64} {
  func.func @_decoder_rnn_kernel(%arg0: memref<64x1xf32, #tpu.memory_space<vmem>>, %arg1: memref<16x32xf32, #tpu.memory_space<vmem>>, %arg2: memref<112x384xf32, #tpu.memory_space<vmem>>, %arg3: memref<64x1xf32, #tpu.memory_space<vmem>>, %arg4: memref<64x32xf32, #tpu.memory_space<vmem>>) attributes {dimension_semantics = [], scalar_prefetch = 0 : i64, scratch_operands = 1 : i64, tpu.core_type = #tpu.core_type<tc>} {
    %c0 = arith.constant 0 : index
    %c0_0 = arith.constant 0 : index
    %0 = vector.load %arg2[%c0, %c0_0] : memref<112x384xf32, #tpu.memory_space<vmem>>, vector<64x384xf32>
    %c64 = arith.constant 64 : index
    %c256 = arith.constant 256 : index
    %1 = vector.load %arg2[%c64, %c256] : memref<112x384xf32, #tpu.memory_space<vmem>>, vector<1x96xf32>
    %c64_1 = arith.constant 64 : index
    %c0_2 = arith.constant 0 : index
    %2 = vector.load %arg2[%c64_1, %c0_2] : memref<112x384xf32, #tpu.memory_space<vmem>>, vector<1x96xf32>
    %c65 = arith.constant 65 : index
    %c0_3 = arith.constant 0 : index
    %3 = vector.load %arg2[%c65, %c0_3] : memref<112x384xf32, #tpu.memory_space<vmem>>, vector<1x96xf32>
    %c64_4 = arith.constant 64 : index
    %c128 = arith.constant 128 : index
    %4 = vector.load %arg2[%c64_4, %c128] : memref<112x384xf32, #tpu.memory_space<vmem>>, vector<1x32xf32>
    %5 = vector.shape_cast %4 : vector<1x32xf32> to vector<1x32xf32>
    %6 = vector.broadcast %5 : vector<1x32xf32> to vector<8x32xf32>
    %c65_5 = arith.constant 65 : index
    %c128_6 = arith.constant 128 : index
    %7 = vector.load %arg2[%c65_5, %c128_6] : memref<112x384xf32, #tpu.memory_space<vmem>>, vector<1x32xf32>
    %8 = vector.shape_cast %7 : vector<1x32xf32> to vector<1x32xf32>
    %9 = vector.broadcast %8 : vector<1x32xf32> to vector<8x32xf32>
    %10 = vector.shape_cast %3 : vector<1x96xf32> to vector<1x96xf32>
    %11 = vector.broadcast %10 : vector<1x96xf32> to vector<8x96xf32>
    %c72 = arith.constant 72 : index
    %c0_7 = arith.constant 0 : index
    %12 = vector.load %arg2[%c72, %c0_7] : memref<112x384xf32, #tpu.memory_space<vmem>>, vector<32x1xf32>
    %c104 = arith.constant 104 : index
    %c0_8 = arith.constant 0 : index
    %13 = vector.load %arg2[%c104, %c0_8] : memref<112x384xf32, #tpu.memory_space<vmem>>, vector<1x1xf32>
    %c0_9 = arith.constant 0 : index
    %c0_10 = arith.constant 0 : index
    %14 = vector.load %arg0[%c0_9, %c0_10] : memref<64x1xf32, #tpu.memory_space<vmem>>, vector<64x1xf32>
    %15 = vector.broadcast %14 : vector<64x1xf32> to vector<64x96xf32>
    %16 = vector.broadcast %1 : vector<1x96xf32> to vector<64x96xf32>
    %17 = arith.mulf %15, %16 : vector<64x96xf32>
    %18 = vector.broadcast %2 : vector<1x96xf32> to vector<64x96xf32>
    %19 = arith.addf %17, %18 : vector<64x96xf32>
    %c0_11 = arith.constant 0 : index
    %c0_12 = arith.constant 0 : index
    %20 = vector.load %arg1[%c0_11, %c0_12] : memref<16x32xf32, #tpu.memory_space<vmem>>, vector<8x32xf32>
    %c8 = arith.constant 8 : index
    %c0_13 = arith.constant 0 : index
    %21 = vector.load %arg1[%c8, %c0_13] : memref<16x32xf32, #tpu.memory_space<vmem>>, vector<8x32xf32>
    %22 = tpu.concatenate %20, %21 in 1 : vector<8x32xf32>, vector<8x32xf32> -> vector<8x64xf32>
    %cst = arith.constant dense<0.000000e+00> : vector<8x384xf32>
    %23 = tpu.matmul %22, %0, %cst {dimension_numbers = #tpu.dot_dimension_numbers<[1], [0], [0], [1], [0, 0, 1, 1], [], []>} : vector<8x64xf32>, vector<64x384xf32>, vector<8x384xf32> -> vector<8x384xf32>
    %24 = vector.extract_strided_slice %23 {offsets = [0, 0], sizes = [8, 96], strides = [1, 1]} : vector<8x384xf32> to vector<8x96xf32>
    %25 = vector.extract_strided_slice %19 {offsets = [0, 0], sizes = [8, 96], strides = [1, 1]} : vector<64x96xf32> to vector<8x96xf32>
    %26 = vector.extract_strided_slice %25 {offsets = [0, 0], sizes = [8, 32], strides = [1, 1]} : vector<8x96xf32> to vector<8x32xf32>
    %27 = vector.extract_strided_slice %24 {offsets = [0, 0], sizes = [8, 32], strides = [1, 1]} : vector<8x96xf32> to vector<8x32xf32>
    %28 = arith.addf %26, %27 : vector<8x32xf32>
    %29 = arith.negf %28 : vector<8x32xf32>
    %30 = math.exp %29 : vector<8x32xf32>
    %cst_14 = arith.constant 1.000000e+00 : f32
    %31 = vector.broadcast %cst_14 : f32 to vector<8x32xf32>
    %32 = arith.addf %31, %30 : vector<8x32xf32>
    %33 = arith.divf %31, %32 : vector<8x32xf32>
    %34 = vector.extract_strided_slice %25 {offsets = [0, 32], sizes = [8, 32], strides = [1, 1]} : vector<8x96xf32> to vector<8x32xf32>
    %35 = vector.extract_strided_slice %24 {offsets = [0, 32], sizes = [8, 32], strides = [1, 1]} : vector<8x96xf32> to vector<8x32xf32>
    %36 = arith.addf %34, %35 : vector<8x32xf32>
    %37 = arith.negf %36 : vector<8x32xf32>
    %38 = math.exp %37 : vector<8x32xf32>
    %cst_15 = arith.constant 1.000000e+00 : f32
    %39 = vector.broadcast %cst_15 : f32 to vector<8x32xf32>
    %40 = arith.addf %39, %38 : vector<8x32xf32>
    %41 = arith.divf %39, %40 : vector<8x32xf32>
    %42 = vector.extract_strided_slice %25 {offsets = [0, 64], sizes = [8, 32], strides = [1, 1]} : vector<8x96xf32> to vector<8x32xf32>
    %43 = vector.extract_strided_slice %24 {offsets = [0, 64], sizes = [8, 32], strides = [1, 1]} : vector<8x96xf32> to vector<8x32xf32>
    %44 = arith.addf %43, %6 : vector<8x32xf32>
    %45 = arith.mulf %33, %44 : vector<8x32xf32>
    %46 = arith.addf %42, %45 : vector<8x32xf32>
    %47 = math.tanh %46 : vector<8x32xf32>
    %cst_16 = arith.constant 1.000000e+00 : f32
    %48 = vector.broadcast %cst_16 : f32 to vector<8x32xf32>
    %49 = arith.subf %48, %41 : vector<8x32xf32>
    %50 = arith.mulf %49, %47 : vector<8x32xf32>
    %51 = arith.mulf %41, %20 : vector<8x32xf32>
    %52 = arith.addf %50, %51 : vector<8x32xf32>
    %53 = tpu.concatenate %52, %21 in 1 : vector<8x32xf32>, vector<8x32xf32> -> vector<8x64xf32>
    %cst_17 = arith.constant dense<0.000000e+00> : vector<8x384xf32>
    %54 = tpu.matmul %53, %0, %cst_17 {dimension_numbers = #tpu.dot_dimension_numbers<[1], [0], [0], [1], [0, 0, 1, 1], [], []>} : vector<8x64xf32>, vector<64x384xf32>, vector<8x384xf32> -> vector<8x384xf32>
    %55 = vector.extract_strided_slice %54 {offsets = [0, 0], sizes = [8, 96], strides = [1, 1]} : vector<8x384xf32> to vector<8x96xf32>
    %56 = vector.extract_strided_slice %19 {offsets = [8, 0], sizes = [8, 96], strides = [1, 1]} : vector<64x96xf32> to vector<8x96xf32>
    %57 = vector.extract_strided_slice %56 {offsets = [0, 0], sizes = [8, 32], strides = [1, 1]} : vector<8x96xf32> to vector<8x32xf32>
    %58 = vector.extract_strided_slice %55 {offsets = [0, 0], sizes = [8, 32], strides = [1, 1]} : vector<8x96xf32> to vector<8x32xf32>
    %59 = arith.addf %57, %58 : vector<8x32xf32>
    %60 = arith.negf %59 : vector<8x32xf32>
    %61 = math.exp %60 : vector<8x32xf32>
    %cst_18 = arith.constant 1.000000e+00 : f32
    %62 = vector.broadcast %cst_18 : f32 to vector<8x32xf32>
    %63 = arith.addf %62, %61 : vector<8x32xf32>
    %64 = arith.divf %62, %63 : vector<8x32xf32>
    %65 = vector.extract_strided_slice %56 {offsets = [0, 32], sizes = [8, 32], strides = [1, 1]} : vector<8x96xf32> to vector<8x32xf32>
    %66 = vector.extract_strided_slice %55 {offsets = [0, 32], sizes = [8, 32], strides = [1, 1]} : vector<8x96xf32> to vector<8x32xf32>
    %67 = arith.addf %65, %66 : vector<8x32xf32>
    %68 = arith.negf %67 : vector<8x32xf32>
    %69 = math.exp %68 : vector<8x32xf32>
    %cst_19 = arith.constant 1.000000e+00 : f32
    %70 = vector.broadcast %cst_19 : f32 to vector<8x32xf32>
    %71 = arith.addf %70, %69 : vector<8x32xf32>
    %72 = arith.divf %70, %71 : vector<8x32xf32>
    %73 = vector.extract_strided_slice %56 {offsets = [0, 64], sizes = [8, 32], strides = [1, 1]} : vector<8x96xf32> to vector<8x32xf32>
    %74 = vector.extract_strided_slice %55 {offsets = [0, 64], sizes = [8, 32], strides = [1, 1]} : vector<8x96xf32> to vector<8x32xf32>
    %75 = arith.addf %74, %6 : vector<8x32xf32>
    %76 = arith.mulf %64, %75 : vector<8x32xf32>
    %77 = arith.addf %73, %76 : vector<8x32xf32>
    %78 = math.tanh %77 : vector<8x32xf32>
    %cst_20 = arith.constant 1.000000e+00 : f32
    %79 = vector.broadcast %cst_20 : f32 to vector<8x32xf32>
    %80 = arith.subf %79, %72 : vector<8x32xf32>
    %81 = arith.mulf %80, %78 : vector<8x32xf32>
    %82 = arith.mulf %72, %52 : vector<8x32xf32>
    %83 = arith.addf %81, %82 : vector<8x32xf32>
    %84 = vector.extract_strided_slice %54 {offsets = [0, 128], sizes = [8, 96], strides = [1, 1]} : vector<8x384xf32> to vector<8x96xf32>
    %85 = vector.extract_strided_slice %54 {offsets = [0, 256], sizes = [8, 96], strides = [1, 1]} : vector<8x384xf32> to vector<8x96xf32>
    %86 = arith.addf %85, %11 : vector<8x96xf32>
    %87 = vector.extract_strided_slice %86 {offsets = [0, 0], sizes = [8, 32], strides = [1, 1]} : vector<8x96xf32> to vector<8x32xf32>
    %88 = vector.extract_strided_slice %84 {offsets = [0, 0], sizes = [8, 32], strides = [1, 1]} : vector<8x96xf32> to vector<8x32xf32>
    %89 = arith.addf %87, %88 : vector<8x32xf32>
    %90 = arith.negf %89 : vector<8x32xf32>
    %91 = math.exp %90 : vector<8x32xf32>
    %cst_21 = arith.constant 1.000000e+00 : f32
    %92 = vector.broadcast %cst_21 : f32 to vector<8x32xf32>
    %93 = arith.addf %92, %91 : vector<8x32xf32>
    %94 = arith.divf %92, %93 : vector<8x32xf32>
    %95 = vector.extract_strided_slice %86 {offsets = [0, 32], sizes = [8, 32], strides = [1, 1]} : vector<8x96xf32> to vector<8x32xf32>
    %96 = vector.extract_strided_slice %84 {offsets = [0, 32], sizes = [8, 32], strides = [1, 1]} : vector<8x96xf32> to vector<8x32xf32>
    %97 = arith.addf %95, %96 : vector<8x32xf32>
    %98 = arith.negf %97 : vector<8x32xf32>
    %99 = math.exp %98 : vector<8x32xf32>
    %cst_22 = arith.constant 1.000000e+00 : f32
    %100 = vector.broadcast %cst_22 : f32 to vector<8x32xf32>
    %101 = arith.addf %100, %99 : vector<8x32xf32>
    %102 = arith.divf %100, %101 : vector<8x32xf32>
    %103 = vector.extract_strided_slice %86 {offsets = [0, 64], sizes = [8, 32], strides = [1, 1]} : vector<8x96xf32> to vector<8x32xf32>
    %104 = vector.extract_strided_slice %84 {offsets = [0, 64], sizes = [8, 32], strides = [1, 1]} : vector<8x96xf32> to vector<8x32xf32>
    %105 = arith.addf %104, %9 : vector<8x32xf32>
    %106 = arith.mulf %94, %105 : vector<8x32xf32>
    %107 = arith.addf %103, %106 : vector<8x32xf32>
    %108 = math.tanh %107 : vector<8x32xf32>
    %cst_23 = arith.constant 1.000000e+00 : f32
    %109 = vector.broadcast %cst_23 : f32 to vector<8x32xf32>
    %110 = arith.subf %109, %102 : vector<8x32xf32>
    %111 = arith.mulf %110, %108 : vector<8x32xf32>
    %112 = arith.mulf %102, %21 : vector<8x32xf32>
    %113 = arith.addf %111, %112 : vector<8x32xf32>
    %c0_24 = arith.constant 0 : index
    %c0_25 = arith.constant 0 : index
    %114 = vector.load %arg4[%c0_24, %c0_25] : memref<64x32xf32, #tpu.memory_space<vmem>>, vector<8x32xf32>
    tpu.vector_store %arg4[%c0_24, %c0_25], %113 {strides = array<i32>} : memref<64x32xf32, #tpu.memory_space<vmem>>, vector<8x32xf32>,
    %115 = tpu.concatenate %83, %113 in 1 : vector<8x32xf32>, vector<8x32xf32> -> vector<8x64xf32>
    %cst_26 = arith.constant dense<0.000000e+00> : vector<8x384xf32>
    %116 = tpu.matmul %115, %0, %cst_26 {dimension_numbers = #tpu.dot_dimension_numbers<[1], [0], [0], [1], [0, 0, 1, 1], [], []>} : vector<8x64xf32>, vector<64x384xf32>, vector<8x384xf32> -> vector<8x384xf32>
    %117 = vector.extract_strided_slice %116 {offsets = [0, 0], sizes = [8, 96], strides = [1, 1]} : vector<8x384xf32> to vector<8x96xf32>
    %118 = vector.extract_strided_slice %19 {offsets = [16, 0], sizes = [8, 96], strides = [1, 1]} : vector<64x96xf32> to vector<8x96xf32>
    %119 = vector.extract_strided_slice %118 {offsets = [0, 0], sizes = [8, 32], strides = [1, 1]} : vector<8x96xf32> to vector<8x32xf32>
    %120 = vector.extract_strided_slice %117 {offsets = [0, 0], sizes = [8, 32], strides = [1, 1]} : vector<8x96xf32> to vector<8x32xf32>
    %121 = arith.addf %119, %120 : vector<8x32xf32>
    %122 = arith.negf %121 : vector<8x32xf32>
    %123 = math.exp %122 : vector<8x32xf32>
    %cst_27 = arith.constant 1.000000e+00 : f32
    %124 = vector.broadcast %cst_27 : f32 to vector<8x32xf32>
    %125 = arith.addf %124, %123 : vector<8x32xf32>
    %126 = arith.divf %124, %125 : vector<8x32xf32>
    %127 = vector.extract_strided_slice %118 {offsets = [0, 32], sizes = [8, 32], strides = [1, 1]} : vector<8x96xf32> to vector<8x32xf32>
    %128 = vector.extract_strided_slice %117 {offsets = [0, 32], sizes = [8, 32], strides = [1, 1]} : vector<8x96xf32> to vector<8x32xf32>
    %129 = arith.addf %127, %128 : vector<8x32xf32>
    %130 = arith.negf %129 : vector<8x32xf32>
    %131 = math.exp %130 : vector<8x32xf32>
    %cst_28 = arith.constant 1.000000e+00 : f32
    %132 = vector.broadcast %cst_28 : f32 to vector<8x32xf32>
    %133 = arith.addf %132, %131 : vector<8x32xf32>
    %134 = arith.divf %132, %133 : vector<8x32xf32>
    %135 = vector.extract_strided_slice %118 {offsets = [0, 64], sizes = [8, 32], strides = [1, 1]} : vector<8x96xf32> to vector<8x32xf32>
    %136 = vector.extract_strided_slice %117 {offsets = [0, 64], sizes = [8, 32], strides = [1, 1]} : vector<8x96xf32> to vector<8x32xf32>
    %137 = arith.addf %136, %6 : vector<8x32xf32>
    %138 = arith.mulf %126, %137 : vector<8x32xf32>
    %139 = arith.addf %135, %138 : vector<8x32xf32>
    %140 = math.tanh %139 : vector<8x32xf32>
    %cst_29 = arith.constant 1.000000e+00 : f32
    %141 = vector.broadcast %cst_29 : f32 to vector<8x32xf32>
    %142 = arith.subf %141, %134 : vector<8x32xf32>
    %143 = arith.mulf %142, %140 : vector<8x32xf32>
    %144 = arith.mulf %134, %83 : vector<8x32xf32>
    %145 = arith.addf %143, %144 : vector<8x32xf32>
    %146 = vector.extract_strided_slice %116 {offsets = [0, 128], sizes = [8, 96], strides = [1, 1]} : vector<8x384xf32> to vector<8x96xf32>
    %147 = vector.extract_strided_slice %116 {offsets = [0, 256], sizes = [8, 96], strides = [1, 1]} : vector<8x384xf32> to vector<8x96xf32>
    %148 = arith.addf %147, %11 : vector<8x96xf32>
    %149 = vector.extract_strided_slice %148 {offsets = [0, 0], sizes = [8, 32], strides = [1, 1]} : vector<8x96xf32> to vector<8x32xf32>
    %150 = vector.extract_strided_slice %146 {offsets = [0, 0], sizes = [8, 32], strides = [1, 1]} : vector<8x96xf32> to vector<8x32xf32>
    %151 = arith.addf %149, %150 : vector<8x32xf32>
    %152 = arith.negf %151 : vector<8x32xf32>
    %153 = math.exp %152 : vector<8x32xf32>
    %cst_30 = arith.constant 1.000000e+00 : f32
    %154 = vector.broadcast %cst_30 : f32 to vector<8x32xf32>
    %155 = arith.addf %154, %153 : vector<8x32xf32>
    %156 = arith.divf %154, %155 : vector<8x32xf32>
    %157 = vector.extract_strided_slice %148 {offsets = [0, 32], sizes = [8, 32], strides = [1, 1]} : vector<8x96xf32> to vector<8x32xf32>
    %158 = vector.extract_strided_slice %146 {offsets = [0, 32], sizes = [8, 32], strides = [1, 1]} : vector<8x96xf32> to vector<8x32xf32>
    %159 = arith.addf %157, %158 : vector<8x32xf32>
    %160 = arith.negf %159 : vector<8x32xf32>
    %161 = math.exp %160 : vector<8x32xf32>
    %cst_31 = arith.constant 1.000000e+00 : f32
    %162 = vector.broadcast %cst_31 : f32 to vector<8x32xf32>
    %163 = arith.addf %162, %161 : vector<8x32xf32>
    %164 = arith.divf %162, %163 : vector<8x32xf32>
    %165 = vector.extract_strided_slice %148 {offsets = [0, 64], sizes = [8, 32], strides = [1, 1]} : vector<8x96xf32> to vector<8x32xf32>
    %166 = vector.extract_strided_slice %146 {offsets = [0, 64], sizes = [8, 32], strides = [1, 1]} : vector<8x96xf32> to vector<8x32xf32>
    %167 = arith.addf %166, %9 : vector<8x32xf32>
    %168 = arith.mulf %156, %167 : vector<8x32xf32>
    %169 = arith.addf %165, %168 : vector<8x32xf32>
    %170 = math.tanh %169 : vector<8x32xf32>
    %cst_32 = arith.constant 1.000000e+00 : f32
    %171 = vector.broadcast %cst_32 : f32 to vector<8x32xf32>
    %172 = arith.subf %171, %164 : vector<8x32xf32>
    %173 = arith.mulf %172, %170 : vector<8x32xf32>
    %174 = arith.mulf %164, %113 : vector<8x32xf32>
    %175 = arith.addf %173, %174 : vector<8x32xf32>
    %c8_33 = arith.constant 8 : index
    %c0_34 = arith.constant 0 : index
    %176 = vector.load %arg4[%c8_33, %c0_34] : memref<64x32xf32, #tpu.memory_space<vmem>>, vector<8x32xf32>
    tpu.vector_store %arg4[%c8_33, %c0_34], %175 {strides = array<i32>} : memref<64x32xf32, #tpu.memory_space<vmem>>, vector<8x32xf32>,
    %177 = tpu.concatenate %145, %175 in 1 : vector<8x32xf32>, vector<8x32xf32> -> vector<8x64xf32>
    %cst_35 = arith.constant dense<0.000000e+00> : vector<8x384xf32>
    %178 = tpu.matmul %177, %0, %cst_35 {dimension_numbers = #tpu.dot_dimension_numbers<[1], [0], [0], [1], [0, 0, 1, 1], [], []>} : vector<8x64xf32>, vector<64x384xf32>, vector<8x384xf32> -> vector<8x384xf32>
    %179 = vector.extract_strided_slice %178 {offsets = [0, 0], sizes = [8, 96], strides = [1, 1]} : vector<8x384xf32> to vector<8x96xf32>
    %180 = vector.extract_strided_slice %19 {offsets = [24, 0], sizes = [8, 96], strides = [1, 1]} : vector<64x96xf32> to vector<8x96xf32>
    %181 = vector.extract_strided_slice %180 {offsets = [0, 0], sizes = [8, 32], strides = [1, 1]} : vector<8x96xf32> to vector<8x32xf32>
    %182 = vector.extract_strided_slice %179 {offsets = [0, 0], sizes = [8, 32], strides = [1, 1]} : vector<8x96xf32> to vector<8x32xf32>
    %183 = arith.addf %181, %182 : vector<8x32xf32>
    %184 = arith.negf %183 : vector<8x32xf32>
    %185 = math.exp %184 : vector<8x32xf32>
    %cst_36 = arith.constant 1.000000e+00 : f32
    %186 = vector.broadcast %cst_36 : f32 to vector<8x32xf32>
    %187 = arith.addf %186, %185 : vector<8x32xf32>
    %188 = arith.divf %186, %187 : vector<8x32xf32>
    %189 = vector.extract_strided_slice %180 {offsets = [0, 32], sizes = [8, 32], strides = [1, 1]} : vector<8x96xf32> to vector<8x32xf32>
    %190 = vector.extract_strided_slice %179 {offsets = [0, 32], sizes = [8, 32], strides = [1, 1]} : vector<8x96xf32> to vector<8x32xf32>
    %191 = arith.addf %189, %190 : vector<8x32xf32>
    %192 = arith.negf %191 : vector<8x32xf32>
    %193 = math.exp %192 : vector<8x32xf32>
    %cst_37 = arith.constant 1.000000e+00 : f32
    %194 = vector.broadcast %cst_37 : f32 to vector<8x32xf32>
    %195 = arith.addf %194, %193 : vector<8x32xf32>
    %196 = arith.divf %194, %195 : vector<8x32xf32>
    %197 = vector.extract_strided_slice %180 {offsets = [0, 64], sizes = [8, 32], strides = [1, 1]} : vector<8x96xf32> to vector<8x32xf32>
    %198 = vector.extract_strided_slice %179 {offsets = [0, 64], sizes = [8, 32], strides = [1, 1]} : vector<8x96xf32> to vector<8x32xf32>
    %199 = arith.addf %198, %6 : vector<8x32xf32>
    %200 = arith.mulf %188, %199 : vector<8x32xf32>
    %201 = arith.addf %197, %200 : vector<8x32xf32>
    %202 = math.tanh %201 : vector<8x32xf32>
    %cst_38 = arith.constant 1.000000e+00 : f32
    %203 = vector.broadcast %cst_38 : f32 to vector<8x32xf32>
    %204 = arith.subf %203, %196 : vector<8x32xf32>
    %205 = arith.mulf %204, %202 : vector<8x32xf32>
    %206 = arith.mulf %196, %145 : vector<8x32xf32>
    %207 = arith.addf %205, %206 : vector<8x32xf32>
    %208 = vector.extract_strided_slice %178 {offsets = [0, 128], sizes = [8, 96], strides = [1, 1]} : vector<8x384xf32> to vector<8x96xf32>
    %209 = vector.extract_strided_slice %178 {offsets = [0, 256], sizes = [8, 96], strides = [1, 1]} : vector<8x384xf32> to vector<8x96xf32>
    %210 = arith.addf %209, %11 : vector<8x96xf32>
    %211 = vector.extract_strided_slice %210 {offsets = [0, 0], sizes = [8, 32], strides = [1, 1]} : vector<8x96xf32> to vector<8x32xf32>
    %212 = vector.extract_strided_slice %208 {offsets = [0, 0], sizes = [8, 32], strides = [1, 1]} : vector<8x96xf32> to vector<8x32xf32>
    %213 = arith.addf %211, %212 : vector<8x32xf32>
    %214 = arith.negf %213 : vector<8x32xf32>
    %215 = math.exp %214 : vector<8x32xf32>
    %cst_39 = arith.constant 1.000000e+00 : f32
    %216 = vector.broadcast %cst_39 : f32 to vector<8x32xf32>
    %217 = arith.addf %216, %215 : vector<8x32xf32>
    %218 = arith.divf %216, %217 : vector<8x32xf32>
    %219 = vector.extract_strided_slice %210 {offsets = [0, 32], sizes = [8, 32], strides = [1, 1]} : vector<8x96xf32> to vector<8x32xf32>
    %220 = vector.extract_strided_slice %208 {offsets = [0, 32], sizes = [8, 32], strides = [1, 1]} : vector<8x96xf32> to vector<8x32xf32>
    %221 = arith.addf %219, %220 : vector<8x32xf32>
    %222 = arith.negf %221 : vector<8x32xf32>
    %223 = math.exp %222 : vector<8x32xf32>
    %cst_40 = arith.constant 1.000000e+00 : f32
    %224 = vector.broadcast %cst_40 : f32 to vector<8x32xf32>
    %225 = arith.addf %224, %223 : vector<8x32xf32>
    %226 = arith.divf %224, %225 : vector<8x32xf32>
    %227 = vector.extract_strided_slice %210 {offsets = [0, 64], sizes = [8, 32], strides = [1, 1]} : vector<8x96xf32> to vector<8x32xf32>
    %228 = vector.extract_strided_slice %208 {offsets = [0, 64], sizes = [8, 32], strides = [1, 1]} : vector<8x96xf32> to vector<8x32xf32>
    %229 = arith.addf %228, %9 : vector<8x32xf32>
    %230 = arith.mulf %218, %229 : vector<8x32xf32>
    %231 = arith.addf %227, %230 : vector<8x32xf32>
    %232 = math.tanh %231 : vector<8x32xf32>
    %cst_41 = arith.constant 1.000000e+00 : f32
    %233 = vector.broadcast %cst_41 : f32 to vector<8x32xf32>
    %234 = arith.subf %233, %226 : vector<8x32xf32>
    %235 = arith.mulf %234, %232 : vector<8x32xf32>
    %236 = arith.mulf %226, %175 : vector<8x32xf32>
    %237 = arith.addf %235, %236 : vector<8x32xf32>
    %c16 = arith.constant 16 : index
    %c0_42 = arith.constant 0 : index
    %238 = vector.load %arg4[%c16, %c0_42] : memref<64x32xf32, #tpu.memory_space<vmem>>, vector<8x32xf32>
    tpu.vector_store %arg4[%c16, %c0_42], %237 {strides = array<i32>} : memref<64x32xf32, #tpu.memory_space<vmem>>, vector<8x32xf32>,
    %239 = tpu.concatenate %207, %237 in 1 : vector<8x32xf32>, vector<8x32xf32> -> vector<8x64xf32>
    %cst_43 = arith.constant dense<0.000000e+00> : vector<8x384xf32>
    %240 = tpu.matmul %239, %0, %cst_43 {dimension_numbers = #tpu.dot_dimension_numbers<[1], [0], [0], [1], [0, 0, 1, 1], [], []>} : vector<8x64xf32>, vector<64x384xf32>, vector<8x384xf32> -> vector<8x384xf32>
    %241 = vector.extract_strided_slice %240 {offsets = [0, 0], sizes = [8, 96], strides = [1, 1]} : vector<8x384xf32> to vector<8x96xf32>
    %242 = vector.extract_strided_slice %19 {offsets = [32, 0], sizes = [8, 96], strides = [1, 1]} : vector<64x96xf32> to vector<8x96xf32>
    %243 = vector.extract_strided_slice %242 {offsets = [0, 0], sizes = [8, 32], strides = [1, 1]} : vector<8x96xf32> to vector<8x32xf32>
    %244 = vector.extract_strided_slice %241 {offsets = [0, 0], sizes = [8, 32], strides = [1, 1]} : vector<8x96xf32> to vector<8x32xf32>
    %245 = arith.addf %243, %244 : vector<8x32xf32>
    %246 = arith.negf %245 : vector<8x32xf32>
    %247 = math.exp %246 : vector<8x32xf32>
    %cst_44 = arith.constant 1.000000e+00 : f32
    %248 = vector.broadcast %cst_44 : f32 to vector<8x32xf32>
    %249 = arith.addf %248, %247 : vector<8x32xf32>
    %250 = arith.divf %248, %249 : vector<8x32xf32>
    %251 = vector.extract_strided_slice %242 {offsets = [0, 32], sizes = [8, 32], strides = [1, 1]} : vector<8x96xf32> to vector<8x32xf32>
    %252 = vector.extract_strided_slice %241 {offsets = [0, 32], sizes = [8, 32], strides = [1, 1]} : vector<8x96xf32> to vector<8x32xf32>
    %253 = arith.addf %251, %252 : vector<8x32xf32>
    %254 = arith.negf %253 : vector<8x32xf32>
    %255 = math.exp %254 : vector<8x32xf32>
    %cst_45 = arith.constant 1.000000e+00 : f32
    %256 = vector.broadcast %cst_45 : f32 to vector<8x32xf32>
    %257 = arith.addf %256, %255 : vector<8x32xf32>
    %258 = arith.divf %256, %257 : vector<8x32xf32>
    %259 = vector.extract_strided_slice %242 {offsets = [0, 64], sizes = [8, 32], strides = [1, 1]} : vector<8x96xf32> to vector<8x32xf32>
    %260 = vector.extract_strided_slice %241 {offsets = [0, 64], sizes = [8, 32], strides = [1, 1]} : vector<8x96xf32> to vector<8x32xf32>
    %261 = arith.addf %260, %6 : vector<8x32xf32>
    %262 = arith.mulf %250, %261 : vector<8x32xf32>
    %263 = arith.addf %259, %262 : vector<8x32xf32>
    %264 = math.tanh %263 : vector<8x32xf32>
    %cst_46 = arith.constant 1.000000e+00 : f32
    %265 = vector.broadcast %cst_46 : f32 to vector<8x32xf32>
    %266 = arith.subf %265, %258 : vector<8x32xf32>
    %267 = arith.mulf %266, %264 : vector<8x32xf32>
    %268 = arith.mulf %258, %207 : vector<8x32xf32>
    %269 = arith.addf %267, %268 : vector<8x32xf32>
    %270 = vector.extract_strided_slice %240 {offsets = [0, 128], sizes = [8, 96], strides = [1, 1]} : vector<8x384xf32> to vector<8x96xf32>
    %271 = vector.extract_strided_slice %240 {offsets = [0, 256], sizes = [8, 96], strides = [1, 1]} : vector<8x384xf32> to vector<8x96xf32>
    %272 = arith.addf %271, %11 : vector<8x96xf32>
    %273 = vector.extract_strided_slice %272 {offsets = [0, 0], sizes = [8, 32], strides = [1, 1]} : vector<8x96xf32> to vector<8x32xf32>
    %274 = vector.extract_strided_slice %270 {offsets = [0, 0], sizes = [8, 32], strides = [1, 1]} : vector<8x96xf32> to vector<8x32xf32>
    %275 = arith.addf %273, %274 : vector<8x32xf32>
    %276 = arith.negf %275 : vector<8x32xf32>
    %277 = math.exp %276 : vector<8x32xf32>
    %cst_47 = arith.constant 1.000000e+00 : f32
    %278 = vector.broadcast %cst_47 : f32 to vector<8x32xf32>
    %279 = arith.addf %278, %277 : vector<8x32xf32>
    %280 = arith.divf %278, %279 : vector<8x32xf32>
    %281 = vector.extract_strided_slice %272 {offsets = [0, 32], sizes = [8, 32], strides = [1, 1]} : vector<8x96xf32> to vector<8x32xf32>
    %282 = vector.extract_strided_slice %270 {offsets = [0, 32], sizes = [8, 32], strides = [1, 1]} : vector<8x96xf32> to vector<8x32xf32>
    %283 = arith.addf %281, %282 : vector<8x32xf32>
    %284 = arith.negf %283 : vector<8x32xf32>
    %285 = math.exp %284 : vector<8x32xf32>
    %cst_48 = arith.constant 1.000000e+00 : f32
    %286 = vector.broadcast %cst_48 : f32 to vector<8x32xf32>
    %287 = arith.addf %286, %285 : vector<8x32xf32>
    %288 = arith.divf %286, %287 : vector<8x32xf32>
    %289 = vector.extract_strided_slice %272 {offsets = [0, 64], sizes = [8, 32], strides = [1, 1]} : vector<8x96xf32> to vector<8x32xf32>
    %290 = vector.extract_strided_slice %270 {offsets = [0, 64], sizes = [8, 32], strides = [1, 1]} : vector<8x96xf32> to vector<8x32xf32>
    %291 = arith.addf %290, %9 : vector<8x32xf32>
    %292 = arith.mulf %280, %291 : vector<8x32xf32>
    %293 = arith.addf %289, %292 : vector<8x32xf32>
    %294 = math.tanh %293 : vector<8x32xf32>
    %cst_49 = arith.constant 1.000000e+00 : f32
    %295 = vector.broadcast %cst_49 : f32 to vector<8x32xf32>
    %296 = arith.subf %295, %288 : vector<8x32xf32>
    %297 = arith.mulf %296, %294 : vector<8x32xf32>
    %298 = arith.mulf %288, %237 : vector<8x32xf32>
    %299 = arith.addf %297, %298 : vector<8x32xf32>
    %c24 = arith.constant 24 : index
    %c0_50 = arith.constant 0 : index
    %300 = vector.load %arg4[%c24, %c0_50] : memref<64x32xf32, #tpu.memory_space<vmem>>, vector<8x32xf32>
    tpu.vector_store %arg4[%c24, %c0_50], %299 {strides = array<i32>} : memref<64x32xf32, #tpu.memory_space<vmem>>, vector<8x32xf32>,
    %301 = tpu.concatenate %269, %299 in 1 : vector<8x32xf32>, vector<8x32xf32> -> vector<8x64xf32>
    %cst_51 = arith.constant dense<0.000000e+00> : vector<8x384xf32>
    %302 = tpu.matmul %301, %0, %cst_51 {dimension_numbers = #tpu.dot_dimension_numbers<[1], [0], [0], [1], [0, 0, 1, 1], [], []>} : vector<8x64xf32>, vector<64x384xf32>, vector<8x384xf32> -> vector<8x384xf32>
    %303 = vector.extract_strided_slice %302 {offsets = [0, 0], sizes = [8, 96], strides = [1, 1]} : vector<8x384xf32> to vector<8x96xf32>
    %304 = vector.extract_strided_slice %19 {offsets = [40, 0], sizes = [8, 96], strides = [1, 1]} : vector<64x96xf32> to vector<8x96xf32>
    %305 = vector.extract_strided_slice %304 {offsets = [0, 0], sizes = [8, 32], strides = [1, 1]} : vector<8x96xf32> to vector<8x32xf32>
    %306 = vector.extract_strided_slice %303 {offsets = [0, 0], sizes = [8, 32], strides = [1, 1]} : vector<8x96xf32> to vector<8x32xf32>
    %307 = arith.addf %305, %306 : vector<8x32xf32>
    %308 = arith.negf %307 : vector<8x32xf32>
    %309 = math.exp %308 : vector<8x32xf32>
    %cst_52 = arith.constant 1.000000e+00 : f32
    %310 = vector.broadcast %cst_52 : f32 to vector<8x32xf32>
    %311 = arith.addf %310, %309 : vector<8x32xf32>
    %312 = arith.divf %310, %311 : vector<8x32xf32>
    %313 = vector.extract_strided_slice %304 {offsets = [0, 32], sizes = [8, 32], strides = [1, 1]} : vector<8x96xf32> to vector<8x32xf32>
    %314 = vector.extract_strided_slice %303 {offsets = [0, 32], sizes = [8, 32], strides = [1, 1]} : vector<8x96xf32> to vector<8x32xf32>
    %315 = arith.addf %313, %314 : vector<8x32xf32>
    %316 = arith.negf %315 : vector<8x32xf32>
    %317 = math.exp %316 : vector<8x32xf32>
    %cst_53 = arith.constant 1.000000e+00 : f32
    %318 = vector.broadcast %cst_53 : f32 to vector<8x32xf32>
    %319 = arith.addf %318, %317 : vector<8x32xf32>
    %320 = arith.divf %318, %319 : vector<8x32xf32>
    %321 = vector.extract_strided_slice %304 {offsets = [0, 64], sizes = [8, 32], strides = [1, 1]} : vector<8x96xf32> to vector<8x32xf32>
    %322 = vector.extract_strided_slice %303 {offsets = [0, 64], sizes = [8, 32], strides = [1, 1]} : vector<8x96xf32> to vector<8x32xf32>
    %323 = arith.addf %322, %6 : vector<8x32xf32>
    %324 = arith.mulf %312, %323 : vector<8x32xf32>
    %325 = arith.addf %321, %324 : vector<8x32xf32>
    %326 = math.tanh %325 : vector<8x32xf32>
    %cst_54 = arith.constant 1.000000e+00 : f32
    %327 = vector.broadcast %cst_54 : f32 to vector<8x32xf32>
    %328 = arith.subf %327, %320 : vector<8x32xf32>
    %329 = arith.mulf %328, %326 : vector<8x32xf32>
    %330 = arith.mulf %320, %269 : vector<8x32xf32>
    %331 = arith.addf %329, %330 : vector<8x32xf32>
    %332 = vector.extract_strided_slice %302 {offsets = [0, 128], sizes = [8, 96], strides = [1, 1]} : vector<8x384xf32> to vector<8x96xf32>
    %333 = vector.extract_strided_slice %302 {offsets = [0, 256], sizes = [8, 96], strides = [1, 1]} : vector<8x384xf32> to vector<8x96xf32>
    %334 = arith.addf %333, %11 : vector<8x96xf32>
    %335 = vector.extract_strided_slice %334 {offsets = [0, 0], sizes = [8, 32], strides = [1, 1]} : vector<8x96xf32> to vector<8x32xf32>
    %336 = vector.extract_strided_slice %332 {offsets = [0, 0], sizes = [8, 32], strides = [1, 1]} : vector<8x96xf32> to vector<8x32xf32>
    %337 = arith.addf %335, %336 : vector<8x32xf32>
    %338 = arith.negf %337 : vector<8x32xf32>
    %339 = math.exp %338 : vector<8x32xf32>
    %cst_55 = arith.constant 1.000000e+00 : f32
    %340 = vector.broadcast %cst_55 : f32 to vector<8x32xf32>
    %341 = arith.addf %340, %339 : vector<8x32xf32>
    %342 = arith.divf %340, %341 : vector<8x32xf32>
    %343 = vector.extract_strided_slice %334 {offsets = [0, 32], sizes = [8, 32], strides = [1, 1]} : vector<8x96xf32> to vector<8x32xf32>
    %344 = vector.extract_strided_slice %332 {offsets = [0, 32], sizes = [8, 32], strides = [1, 1]} : vector<8x96xf32> to vector<8x32xf32>
    %345 = arith.addf %343, %344 : vector<8x32xf32>
    %346 = arith.negf %345 : vector<8x32xf32>
    %347 = math.exp %346 : vector<8x32xf32>
    %cst_56 = arith.constant 1.000000e+00 : f32
    %348 = vector.broadcast %cst_56 : f32 to vector<8x32xf32>
    %349 = arith.addf %348, %347 : vector<8x32xf32>
    %350 = arith.divf %348, %349 : vector<8x32xf32>
    %351 = vector.extract_strided_slice %334 {offsets = [0, 64], sizes = [8, 32], strides = [1, 1]} : vector<8x96xf32> to vector<8x32xf32>
    %352 = vector.extract_strided_slice %332 {offsets = [0, 64], sizes = [8, 32], strides = [1, 1]} : vector<8x96xf32> to vector<8x32xf32>
    %353 = arith.addf %352, %9 : vector<8x32xf32>
    %354 = arith.mulf %342, %353 : vector<8x32xf32>
    %355 = arith.addf %351, %354 : vector<8x32xf32>
    %356 = math.tanh %355 : vector<8x32xf32>
    %cst_57 = arith.constant 1.000000e+00 : f32
    %357 = vector.broadcast %cst_57 : f32 to vector<8x32xf32>
    %358 = arith.subf %357, %350 : vector<8x32xf32>
    %359 = arith.mulf %358, %356 : vector<8x32xf32>
    %360 = arith.mulf %350, %299 : vector<8x32xf32>
    %361 = arith.addf %359, %360 : vector<8x32xf32>
    %c32 = arith.constant 32 : index
    %c0_58 = arith.constant 0 : index
    %362 = vector.load %arg4[%c32, %c0_58] : memref<64x32xf32, #tpu.memory_space<vmem>>, vector<8x32xf32>
    tpu.vector_store %arg4[%c32, %c0_58], %361 {strides = array<i32>} : memref<64x32xf32, #tpu.memory_space<vmem>>, vector<8x32xf32>,
    %363 = tpu.concatenate %331, %361 in 1 : vector<8x32xf32>, vector<8x32xf32> -> vector<8x64xf32>
    %cst_59 = arith.constant dense<0.000000e+00> : vector<8x384xf32>
    %364 = tpu.matmul %363, %0, %cst_59 {dimension_numbers = #tpu.dot_dimension_numbers<[1], [0], [0], [1], [0, 0, 1, 1], [], []>} : vector<8x64xf32>, vector<64x384xf32>, vector<8x384xf32> -> vector<8x384xf32>
    %365 = vector.extract_strided_slice %364 {offsets = [0, 0], sizes = [8, 96], strides = [1, 1]} : vector<8x384xf32> to vector<8x96xf32>
    %366 = vector.extract_strided_slice %19 {offsets = [48, 0], sizes = [8, 96], strides = [1, 1]} : vector<64x96xf32> to vector<8x96xf32>
    %367 = vector.extract_strided_slice %366 {offsets = [0, 0], sizes = [8, 32], strides = [1, 1]} : vector<8x96xf32> to vector<8x32xf32>
    %368 = vector.extract_strided_slice %365 {offsets = [0, 0], sizes = [8, 32], strides = [1, 1]} : vector<8x96xf32> to vector<8x32xf32>
    %369 = arith.addf %367, %368 : vector<8x32xf32>
    %370 = arith.negf %369 : vector<8x32xf32>
    %371 = math.exp %370 : vector<8x32xf32>
    %cst_60 = arith.constant 1.000000e+00 : f32
    %372 = vector.broadcast %cst_60 : f32 to vector<8x32xf32>
    %373 = arith.addf %372, %371 : vector<8x32xf32>
    %374 = arith.divf %372, %373 : vector<8x32xf32>
    %375 = vector.extract_strided_slice %366 {offsets = [0, 32], sizes = [8, 32], strides = [1, 1]} : vector<8x96xf32> to vector<8x32xf32>
    %376 = vector.extract_strided_slice %365 {offsets = [0, 32], sizes = [8, 32], strides = [1, 1]} : vector<8x96xf32> to vector<8x32xf32>
    %377 = arith.addf %375, %376 : vector<8x32xf32>
    %378 = arith.negf %377 : vector<8x32xf32>
    %379 = math.exp %378 : vector<8x32xf32>
    %cst_61 = arith.constant 1.000000e+00 : f32
    %380 = vector.broadcast %cst_61 : f32 to vector<8x32xf32>
    %381 = arith.addf %380, %379 : vector<8x32xf32>
    %382 = arith.divf %380, %381 : vector<8x32xf32>
    %383 = vector.extract_strided_slice %366 {offsets = [0, 64], sizes = [8, 32], strides = [1, 1]} : vector<8x96xf32> to vector<8x32xf32>
    %384 = vector.extract_strided_slice %365 {offsets = [0, 64], sizes = [8, 32], strides = [1, 1]} : vector<8x96xf32> to vector<8x32xf32>
    %385 = arith.addf %384, %6 : vector<8x32xf32>
    %386 = arith.mulf %374, %385 : vector<8x32xf32>
    %387 = arith.addf %383, %386 : vector<8x32xf32>
    %388 = math.tanh %387 : vector<8x32xf32>
    %cst_62 = arith.constant 1.000000e+00 : f32
    %389 = vector.broadcast %cst_62 : f32 to vector<8x32xf32>
    %390 = arith.subf %389, %382 : vector<8x32xf32>
    %391 = arith.mulf %390, %388 : vector<8x32xf32>
    %392 = arith.mulf %382, %331 : vector<8x32xf32>
    %393 = arith.addf %391, %392 : vector<8x32xf32>
    %394 = vector.extract_strided_slice %364 {offsets = [0, 128], sizes = [8, 96], strides = [1, 1]} : vector<8x384xf32> to vector<8x96xf32>
    %395 = vector.extract_strided_slice %364 {offsets = [0, 256], sizes = [8, 96], strides = [1, 1]} : vector<8x384xf32> to vector<8x96xf32>
    %396 = arith.addf %395, %11 : vector<8x96xf32>
    %397 = vector.extract_strided_slice %396 {offsets = [0, 0], sizes = [8, 32], strides = [1, 1]} : vector<8x96xf32> to vector<8x32xf32>
    %398 = vector.extract_strided_slice %394 {offsets = [0, 0], sizes = [8, 32], strides = [1, 1]} : vector<8x96xf32> to vector<8x32xf32>
    %399 = arith.addf %397, %398 : vector<8x32xf32>
    %400 = arith.negf %399 : vector<8x32xf32>
    %401 = math.exp %400 : vector<8x32xf32>
    %cst_63 = arith.constant 1.000000e+00 : f32
    %402 = vector.broadcast %cst_63 : f32 to vector<8x32xf32>
    %403 = arith.addf %402, %401 : vector<8x32xf32>
    %404 = arith.divf %402, %403 : vector<8x32xf32>
    %405 = vector.extract_strided_slice %396 {offsets = [0, 32], sizes = [8, 32], strides = [1, 1]} : vector<8x96xf32> to vector<8x32xf32>
    %406 = vector.extract_strided_slice %394 {offsets = [0, 32], sizes = [8, 32], strides = [1, 1]} : vector<8x96xf32> to vector<8x32xf32>
    %407 = arith.addf %405, %406 : vector<8x32xf32>
    %408 = arith.negf %407 : vector<8x32xf32>
    %409 = math.exp %408 : vector<8x32xf32>
    %cst_64 = arith.constant 1.000000e+00 : f32
    %410 = vector.broadcast %cst_64 : f32 to vector<8x32xf32>
    %411 = arith.addf %410, %409 : vector<8x32xf32>
    %412 = arith.divf %410, %411 : vector<8x32xf32>
    %413 = vector.extract_strided_slice %396 {offsets = [0, 64], sizes = [8, 32], strides = [1, 1]} : vector<8x96xf32> to vector<8x32xf32>
    %414 = vector.extract_strided_slice %394 {offsets = [0, 64], sizes = [8, 32], strides = [1, 1]} : vector<8x96xf32> to vector<8x32xf32>
    %415 = arith.addf %414, %9 : vector<8x32xf32>
    %416 = arith.mulf %404, %415 : vector<8x32xf32>
    %417 = arith.addf %413, %416 : vector<8x32xf32>
    %418 = math.tanh %417 : vector<8x32xf32>
    %cst_65 = arith.constant 1.000000e+00 : f32
    %419 = vector.broadcast %cst_65 : f32 to vector<8x32xf32>
    %420 = arith.subf %419, %412 : vector<8x32xf32>
    %421 = arith.mulf %420, %418 : vector<8x32xf32>
    %422 = arith.mulf %412, %361 : vector<8x32xf32>
    %423 = arith.addf %421, %422 : vector<8x32xf32>
    %c40 = arith.constant 40 : index
    %c0_66 = arith.constant 0 : index
    %424 = vector.load %arg4[%c40, %c0_66] : memref<64x32xf32, #tpu.memory_space<vmem>>, vector<8x32xf32>
    tpu.vector_store %arg4[%c40, %c0_66], %423 {strides = array<i32>} : memref<64x32xf32, #tpu.memory_space<vmem>>, vector<8x32xf32>,
    %425 = tpu.concatenate %393, %423 in 1 : vector<8x32xf32>, vector<8x32xf32> -> vector<8x64xf32>
    %cst_67 = arith.constant dense<0.000000e+00> : vector<8x384xf32>
    %426 = tpu.matmul %425, %0, %cst_67 {dimension_numbers = #tpu.dot_dimension_numbers<[1], [0], [0], [1], [0, 0, 1, 1], [], []>} : vector<8x64xf32>, vector<64x384xf32>, vector<8x384xf32> -> vector<8x384xf32>
    %427 = vector.extract_strided_slice %426 {offsets = [0, 0], sizes = [8, 96], strides = [1, 1]} : vector<8x384xf32> to vector<8x96xf32>
    %428 = vector.extract_strided_slice %19 {offsets = [56, 0], sizes = [8, 96], strides = [1, 1]} : vector<64x96xf32> to vector<8x96xf32>
    %429 = vector.extract_strided_slice %428 {offsets = [0, 0], sizes = [8, 32], strides = [1, 1]} : vector<8x96xf32> to vector<8x32xf32>
    %430 = vector.extract_strided_slice %427 {offsets = [0, 0], sizes = [8, 32], strides = [1, 1]} : vector<8x96xf32> to vector<8x32xf32>
    %431 = arith.addf %429, %430 : vector<8x32xf32>
    %432 = arith.negf %431 : vector<8x32xf32>
    %433 = math.exp %432 : vector<8x32xf32>
    %cst_68 = arith.constant 1.000000e+00 : f32
    %434 = vector.broadcast %cst_68 : f32 to vector<8x32xf32>
    %435 = arith.addf %434, %433 : vector<8x32xf32>
    %436 = arith.divf %434, %435 : vector<8x32xf32>
    %437 = vector.extract_strided_slice %428 {offsets = [0, 32], sizes = [8, 32], strides = [1, 1]} : vector<8x96xf32> to vector<8x32xf32>
    %438 = vector.extract_strided_slice %427 {offsets = [0, 32], sizes = [8, 32], strides = [1, 1]} : vector<8x96xf32> to vector<8x32xf32>
    %439 = arith.addf %437, %438 : vector<8x32xf32>
    %440 = arith.negf %439 : vector<8x32xf32>
    %441 = math.exp %440 : vector<8x32xf32>
    %cst_69 = arith.constant 1.000000e+00 : f32
    %442 = vector.broadcast %cst_69 : f32 to vector<8x32xf32>
    %443 = arith.addf %442, %441 : vector<8x32xf32>
    %444 = arith.divf %442, %443 : vector<8x32xf32>
    %445 = vector.extract_strided_slice %428 {offsets = [0, 64], sizes = [8, 32], strides = [1, 1]} : vector<8x96xf32> to vector<8x32xf32>
    %446 = vector.extract_strided_slice %427 {offsets = [0, 64], sizes = [8, 32], strides = [1, 1]} : vector<8x96xf32> to vector<8x32xf32>
    %447 = arith.addf %446, %6 : vector<8x32xf32>
    %448 = arith.mulf %436, %447 : vector<8x32xf32>
    %449 = arith.addf %445, %448 : vector<8x32xf32>
    %450 = math.tanh %449 : vector<8x32xf32>
    %cst_70 = arith.constant 1.000000e+00 : f32
    %451 = vector.broadcast %cst_70 : f32 to vector<8x32xf32>
    %452 = arith.subf %451, %444 : vector<8x32xf32>
    %453 = arith.mulf %452, %450 : vector<8x32xf32>
    %454 = arith.mulf %444, %393 : vector<8x32xf32>
    %455 = arith.addf %453, %454 : vector<8x32xf32>
    %456 = vector.extract_strided_slice %426 {offsets = [0, 128], sizes = [8, 96], strides = [1, 1]} : vector<8x384xf32> to vector<8x96xf32>
    %457 = vector.extract_strided_slice %426 {offsets = [0, 256], sizes = [8, 96], strides = [1, 1]} : vector<8x384xf32> to vector<8x96xf32>
    %458 = arith.addf %457, %11 : vector<8x96xf32>
    %459 = vector.extract_strided_slice %458 {offsets = [0, 0], sizes = [8, 32], strides = [1, 1]} : vector<8x96xf32> to vector<8x32xf32>
    %460 = vector.extract_strided_slice %456 {offsets = [0, 0], sizes = [8, 32], strides = [1, 1]} : vector<8x96xf32> to vector<8x32xf32>
    %461 = arith.addf %459, %460 : vector<8x32xf32>
    %462 = arith.negf %461 : vector<8x32xf32>
    %463 = math.exp %462 : vector<8x32xf32>
    %cst_71 = arith.constant 1.000000e+00 : f32
    %464 = vector.broadcast %cst_71 : f32 to vector<8x32xf32>
    %465 = arith.addf %464, %463 : vector<8x32xf32>
    %466 = arith.divf %464, %465 : vector<8x32xf32>
    %467 = vector.extract_strided_slice %458 {offsets = [0, 32], sizes = [8, 32], strides = [1, 1]} : vector<8x96xf32> to vector<8x32xf32>
    %468 = vector.extract_strided_slice %456 {offsets = [0, 32], sizes = [8, 32], strides = [1, 1]} : vector<8x96xf32> to vector<8x32xf32>
    %469 = arith.addf %467, %468 : vector<8x32xf32>
    %470 = arith.negf %469 : vector<8x32xf32>
    %471 = math.exp %470 : vector<8x32xf32>
    %cst_72 = arith.constant 1.000000e+00 : f32
    %472 = vector.broadcast %cst_72 : f32 to vector<8x32xf32>
    %473 = arith.addf %472, %471 : vector<8x32xf32>
    %474 = arith.divf %472, %473 : vector<8x32xf32>
    %475 = vector.extract_strided_slice %458 {offsets = [0, 64], sizes = [8, 32], strides = [1, 1]} : vector<8x96xf32> to vector<8x32xf32>
    %476 = vector.extract_strided_slice %456 {offsets = [0, 64], sizes = [8, 32], strides = [1, 1]} : vector<8x96xf32> to vector<8x32xf32>
    %477 = arith.addf %476, %9 : vector<8x32xf32>
    %478 = arith.mulf %466, %477 : vector<8x32xf32>
    %479 = arith.addf %475, %478 : vector<8x32xf32>
    %480 = math.tanh %479 : vector<8x32xf32>
    %cst_73 = arith.constant 1.000000e+00 : f32
    %481 = vector.broadcast %cst_73 : f32 to vector<8x32xf32>
    %482 = arith.subf %481, %474 : vector<8x32xf32>
    %483 = arith.mulf %482, %480 : vector<8x32xf32>
    %484 = arith.mulf %474, %423 : vector<8x32xf32>
    %485 = arith.addf %483, %484 : vector<8x32xf32>
    %c48 = arith.constant 48 : index
    %c0_74 = arith.constant 0 : index
    %486 = vector.load %arg4[%c48, %c0_74] : memref<64x32xf32, #tpu.memory_space<vmem>>, vector<8x32xf32>
    tpu.vector_store %arg4[%c48, %c0_74], %485 {strides = array<i32>} : memref<64x32xf32, #tpu.memory_space<vmem>>, vector<8x32xf32>,
    %487 = tpu.concatenate %455, %485 in 1 : vector<8x32xf32>, vector<8x32xf32> -> vector<8x64xf32>
    %cst_75 = arith.constant dense<0.000000e+00> : vector<8x384xf32>
    %488 = tpu.matmul %487, %0, %cst_75 {dimension_numbers = #tpu.dot_dimension_numbers<[1], [0], [0], [1], [0, 0, 1, 1], [], []>} : vector<8x64xf32>, vector<64x384xf32>, vector<8x384xf32> -> vector<8x384xf32>
    %489 = vector.extract_strided_slice %488 {offsets = [0, 128], sizes = [8, 96], strides = [1, 1]} : vector<8x384xf32> to vector<8x96xf32>
    %490 = vector.extract_strided_slice %488 {offsets = [0, 256], sizes = [8, 96], strides = [1, 1]} : vector<8x384xf32> to vector<8x96xf32>
    %491 = arith.addf %490, %11 : vector<8x96xf32>
    %492 = vector.extract_strided_slice %491 {offsets = [0, 0], sizes = [8, 32], strides = [1, 1]} : vector<8x96xf32> to vector<8x32xf32>
    %493 = vector.extract_strided_slice %489 {offsets = [0, 0], sizes = [8, 32], strides = [1, 1]} : vector<8x96xf32> to vector<8x32xf32>
    %494 = arith.addf %492, %493 : vector<8x32xf32>
    %495 = arith.negf %494 : vector<8x32xf32>
    %496 = math.exp %495 : vector<8x32xf32>
    %cst_76 = arith.constant 1.000000e+00 : f32
    %497 = vector.broadcast %cst_76 : f32 to vector<8x32xf32>
    %498 = arith.addf %497, %496 : vector<8x32xf32>
    %499 = arith.divf %497, %498 : vector<8x32xf32>
    %500 = vector.extract_strided_slice %491 {offsets = [0, 32], sizes = [8, 32], strides = [1, 1]} : vector<8x96xf32> to vector<8x32xf32>
    %501 = vector.extract_strided_slice %489 {offsets = [0, 32], sizes = [8, 32], strides = [1, 1]} : vector<8x96xf32> to vector<8x32xf32>
    %502 = arith.addf %500, %501 : vector<8x32xf32>
    %503 = arith.negf %502 : vector<8x32xf32>
    %504 = math.exp %503 : vector<8x32xf32>
    %cst_77 = arith.constant 1.000000e+00 : f32
    %505 = vector.broadcast %cst_77 : f32 to vector<8x32xf32>
    %506 = arith.addf %505, %504 : vector<8x32xf32>
    %507 = arith.divf %505, %506 : vector<8x32xf32>
    %508 = vector.extract_strided_slice %491 {offsets = [0, 64], sizes = [8, 32], strides = [1, 1]} : vector<8x96xf32> to vector<8x32xf32>
    %509 = vector.extract_strided_slice %489 {offsets = [0, 64], sizes = [8, 32], strides = [1, 1]} : vector<8x96xf32> to vector<8x32xf32>
    %510 = arith.addf %509, %9 : vector<8x32xf32>
    %511 = arith.mulf %499, %510 : vector<8x32xf32>
    %512 = arith.addf %508, %511 : vector<8x32xf32>
    %513 = math.tanh %512 : vector<8x32xf32>
    %cst_78 = arith.constant 1.000000e+00 : f32
    %514 = vector.broadcast %cst_78 : f32 to vector<8x32xf32>
    %515 = arith.subf %514, %507 : vector<8x32xf32>
    %516 = arith.mulf %515, %513 : vector<8x32xf32>
    %517 = arith.mulf %507, %485 : vector<8x32xf32>
    %518 = arith.addf %516, %517 : vector<8x32xf32>
    %c56 = arith.constant 56 : index
    %c0_79 = arith.constant 0 : index
    %519 = vector.load %arg4[%c56, %c0_79] : memref<64x32xf32, #tpu.memory_space<vmem>>, vector<8x32xf32>
    tpu.vector_store %arg4[%c56, %c0_79], %518 {strides = array<i32>} : memref<64x32xf32, #tpu.memory_space<vmem>>, vector<8x32xf32>,
    %c0_80 = arith.constant 0 : index
    %c0_81 = arith.constant 0 : index
    %520 = vector.load %arg4[%c0_80, %c0_81] : memref<64x32xf32, #tpu.memory_space<vmem>>, vector<64x32xf32>
    %cst_82 = arith.constant dense<0.000000e+00> : vector<64x1xf32>
    %521 = tpu.matmul %520, %12, %cst_82 {dimension_numbers = #tpu.dot_dimension_numbers<[1], [0], [0], [1], [0, 0, 1, 1], [], []>} : vector<64x32xf32>, vector<32x1xf32>, vector<64x1xf32> -> vector<64x1xf32>
    %522 = vector.broadcast %13 : vector<1x1xf32> to vector<64x1xf32>
    %523 = arith.addf %521, %522 : vector<64x1xf32>
    %c0_83 = arith.constant 0 : index
    %c0_84 = arith.constant 0 : index
    %524 = vector.load %arg3[%c0_83, %c0_84] : memref<64x1xf32, #tpu.memory_space<vmem>>, vector<64x1xf32>
    tpu.vector_store %arg3[%c0_83, %c0_84], %523 {strides = array<i32>} : memref<64x1xf32, #tpu.memory_space<vmem>>, vector<64x1xf32>,
    return
  }
}

</mosaic_0001>

<llo_original>
// kernel: _lambda_.1
$region0: #{_lambda_.1}
  #allocation0 [shape = 'u32[]', space=smem, size = 0x4, offset = 0x4, fixed_abs, tag = 'smem constant byte address 0x4 - core index']
  #allocation1 [shape = 'u32[144,128]{1,0:T(1,128)}', space=vmem, size = 0x12000, scoped, tag = 'internal scratch']
  #allocation2 [shape = 'f32[64,32]{1,0:T(8,128)}', space=vmem, size = 0x8000, scoped, tag = 'scratch operand']
  %s0 = inlined_call_operand.vmem [shape: f32[64,1], index: 0, kind: input, shape index: {}]
  %s1 = inlined_call_operand.vmem [shape: f32[16,32], index: 1, kind: input, shape index: {}]
  %s2 = inlined_call_operand.hbm [shape: f32[112,384], index: 2, kind: input, shape index: {}]
  %s3 = inlined_call_operand.vmem [shape: f32[64,1], index: 3, kind: output, shape index: {}]
  %s4 = sld [smem:[#allocation0]]
  $region26: #{_lambda_.1} parent=0
    _
  %s6 = ssub.s32 1, %s4
  %s7 = scalar_select 0, %s6, %s4
  $region1: #{_lambda_.1} parent=0
    #allocation3 [shape = 'u8[172032]{0}', space=vmem, size = 0x2a000, scoped, tag = 'input window, operand 2, single buffered']
    #allocation4 [shape = 's32[1]{0}', space=sflag, size = 0x4, scoped, tag = 'scoped memory for _lambda_.1']
    %8 = vsyncpa [#allocation4], 0
    // Predicated region
    $region2: #{_lambda_.1} parent=1 // pred_check
      _
    $region3: #{_lambda_.1} parent=1 // pred_check_branch
      %10 = sbr.rel (0) target = $region5
    $region4: #{_lambda_.1} parent=1 // pred_region
      _
    $region5: #{_lambda_.1} parent=1 // pred_fallthru
      _
    // Predicated region
    $region6: #{_lambda_.1} parent=1 // pred_check
      _
    $region7: #{_lambda_.1} parent=1 // pred_check_branch
      %12 = sbr.rel (0) target = $region9
    $region8: #{_lambda_.1} parent=1 // pred_region
      _
    $region9: #{_lambda_.1} parent=1 // pred_fallthru
      _
    // Predicated region
    $region10: #{_lambda_.1} parent=1 // pred_check
      _
    $region11: #{_lambda_.1} parent=1 // pred_check_branch
      %14 = sbr.rel (0) target = $region13
    $region12: #{_lambda_.1} parent=1 // pred_region
      %s16 = ssub.s32 5376, 5376
      %17 = vsyncadd [#allocation4], %s16
      %s18 = sshll.u32 [#allocation3], 4
      %s19 = int_to_ptr.vmem [resolvable:$true] %s18
      %24 = dma.hbm_to_vmem [thread:$0]  %s2, 5376, %s19, [#allocation4], 384, 384, 24
    $region13: #{_lambda_.1} parent=1 // pred_fallthru
      _
    // Predicated region
    $region14: #{_lambda_.1} parent=1 // pred_check
      _
    $region15: #{_lambda_.1} parent=1 // pred_check_branch
      %26 = sbr.rel (0) target = $region17
    $region16: #{_lambda_.1} parent=1 // pred_region
      %27 = dma.done [#allocation4], 5376
    $region17: #{_lambda_.1} parent=1 // pred_fallthru
      _
    %v28 = vld [vmem:[#allocation3] sm:$0xff]
    %v29 = vld [vmem:[#allocation3 + $0x8] sm:$0xff]
    %v30 = vld [vmem:[#allocation3 + $0x10] sm:$0xff]
    %v31 = vld [vmem:[#allocation3 + $0x18] sm:$0xff]
    %v32 = vld [vmem:[#allocation3 + $0x20] sm:$0xff]
    %v33 = vld [vmem:[#allocation3 + $0x28] sm:$0xff]
    %v34 = vld [vmem:[#allocation3 + $0x30] sm:$0xff]
    %v35 = vld [vmem:[#allocation3 + $0x38] sm:$0xff]
    %v36 = vld [vmem:[#allocation3 + $0x40] sm:$0xff]
    %v37 = vld [vmem:[#allocation3 + $0x48] sm:$0xff]
    %v38 = vld [vmem:[#allocation3 + $0x50] sm:$0xff]
    %v39 = vld [vmem:[#allocation3 + $0x58] sm:$0xff]
    %v40 = vld [vmem:[#allocation3 + $0x60] sm:$0xff]
    %v41 = vld [vmem:[#allocation3 + $0x68] sm:$0xff]
    %v42 = vld [vmem:[#allocation3 + $0x70] sm:$0xff]
    %v43 = vld [vmem:[#allocation3 + $0x78] sm:$0xff]
    %v44 = vld [vmem:[#allocation3 + $0x80] sm:$0xff]
    %v45 = vld [vmem:[#allocation3 + $0x88] sm:$0xff]
    %v46 = vld [vmem:[#allocation3 + $0x90] sm:$0xff]
    %v47 = vld [vmem:[#allocation3 + $0x98] sm:$0xff]
    %v48 = vld [vmem:[#allocation3 + $0xa0] sm:$0xff]
    %v49 = vld [vmem:[#allocation3 + $0xa8] sm:$0xff]
    %v50 = vld [vmem:[#allocation3 + $0xb0] sm:$0xff]
    %v51 = vld [vmem:[#allocation3 + $0xb8] sm:$0xff]
    %v52 = vld [vmem:[#allocation3 + $0xd0] ss:$0 sm:$0xff]
    %v53 = vld [vmem:[#allocation3 + $0xc0] ss:$0 sm:$0xff]
    %v54 = vld [vmem:[#allocation3 + $0xc1] ss:$0 sm:$0xff]
    %v55 = vld [vmem:[#allocation3 + $0xc8] ss:$0 sm:$0xff]
    %v56 = vld [vmem:[#allocation3 + $0xc9] ss:$0 sm:$0xff]
    %v57 = vld [vmem:[#allocation3 + $0xd8] sm:$0xff]
    %v58 = vld [vmem:[#allocation3 + $0xf0] sm:$0xff]
    %v59 = vld [vmem:[#allocation3 + $0x108] sm:$0xff]
    %v60 = vld [vmem:[#allocation3 + $0x120] sm:$0xff]
    %v61 = vld [vmem:[#allocation3 + $0x138] ss:$0 sm:$0xff]
    %v62 = vld [vmem:[%s0] sm:$0xff]
    %v63 = vld [vmem:[%s0 + $0x8] sm:$0xff]
    %v64 = vld [vmem:[%s0 + $0x10] sm:$0xff]
    %v65 = vld [vmem:[%s0 + $0x18] sm:$0xff]
    %v66 = vld [vmem:[%s0 + $0x20] sm:$0xff]
    %v67 = vld [vmem:[%s0 + $0x28] sm:$0xff]
    %v68 = vld [vmem:[%s0 + $0x30] sm:$0xff]
    %v69 = vld [vmem:[%s0 + $0x38] sm:$0xff]
    %71 = vset.pattern.permute.xlu0 0
    %72 = vperm.xlu0 %71, %v62
    %v73 = vpop.permute.xlu0 %72
    %76 = vset.pattern.permute.xlu0 0
    %77 = vperm.xlu0 %76, %v63
    %v78 = vpop.permute.xlu0 %77
    %81 = vset.pattern.permute.xlu0 0
    %82 = vperm.xlu0 %81, %v64
    %v83 = vpop.permute.xlu0 %82
    %86 = vset.pattern.permute.xlu0 0
    %87 = vperm.xlu0 %86, %v65
    %v88 = vpop.permute.xlu0 %87
    %91 = vset.pattern.permute.xlu0 0
    %92 = vperm.xlu0 %91, %v66
    %v93 = vpop.permute.xlu0 %92
    %96 = vset.pattern.permute.xlu0 0
    %97 = vperm.xlu0 %96, %v67
    %v98 = vpop.permute.xlu0 %97
    %101 = vset.pattern.permute.xlu0 0
    %102 = vperm.xlu0 %101, %v68
    %v103 = vpop.permute.xlu0 %102
    %106 = vset.pattern.permute.xlu0 0
    %107 = vperm.xlu0 %106, %v69
    %v108 = vpop.permute.xlu0 %107
    %v110 = vmul.f32 %v73, %v52
    %v111 = vmul.f32 %v78, %v52
    %v112 = vmul.f32 %v83, %v52
    %v113 = vmul.f32 %v88, %v52
    %v114 = vmul.f32 %v93, %v52
    %v115 = vmul.f32 %v98, %v52
    %v116 = vmul.f32 %v103, %v52
    %v117 = vmul.f32 %v108, %v52
    %v118 = vadd.f32 %v110, %v53
    %v119 = vadd.f32 %v111, %v53
    %v120 = vadd.f32 %v112, %v53
    %v121 = vadd.f32 %v113, %v53
    %v122 = vadd.f32 %v114, %v53
    %v123 = vadd.f32 %v115, %v53
    %v124 = vadd.f32 %v116, %v53
    %v125 = vadd.f32 %v117, %v53
    %v126 = vld [vmem:[%s1] sm:$0xff]
    %v127 = vld [vmem:[%s1 + $0x8] sm:$0xff]
    %129 = vrot.lane.b32.xlu0 %v127, 32
    %v130 = vpop.permute.xlu0 %129
    %vm132 = vcmask 261120
    %v133 = vsel %vm132, %v126, %v130
    %vm134 = vcmask 523264
    %v136 = vsel %vm134, %v133, 0
    %138 = vmatprep.subr.mxu0 %v29
    %139 = vmatpush1.msra.mxu0 %v28
    %140 = vmatprep.subr.mxu0 %v32
    %141 = vmatpush1.msra.mxu0 %v31
    %142 = vmatprep.subr.mxu0 %v35
    %143 = vmatpush1.msra.mxu0 %v34
    %144 = vmatprep.subr.mxu0 %v38
    %145 = vmatpush1.msra.mxu0 %v37
    %146 = vmatprep.subr.mxu0 %v41
    %147 = vmatpush1.msra.mxu0 %v40
    %148 = vmatprep.subr.mxu0 %v44
    %149 = vmatpush1.msra.mxu0 %v43
    %150 = vmatprep.subr.mxu0 %v47
    %151 = vmatpush1.msra.mxu0 %v46
    %152 = vmatprep.subr.mxu0 %v50
    %153 = vmatpush1.msra.mxu0 %v49
    %154 = vmatprep.subr.mxu0 0.0
    %155 = vmatpush1.msra.mxu0 0.0
    %156 = vmatprep.subr.mxu0 0.0
    %157 = vmatpush1.msra.mxu0 0.0
    %158 = vmatprep.subr.mxu0 0.0
    %159 = vmatpush1.msra.mxu0 0.0
    %160 = vmatprep.subr.mxu0 0.0
    %161 = vmatpush1.msra.mxu0 0.0
    %162 = vmatprep.subr.mxu0 0.0
    %163 = vmatpush1.msra.mxu0 0.0
    %164 = vmatprep.subr.mxu0 0.0
    %165 = vmatpush1.msra.mxu0 0.0
    %166 = vmatprep.subr.mxu0 0.0
    %167 = vmatpush1.msra.mxu0 0.0
    %168 = vmatprep.subr.mxu0 0.0
    %169 = vmatpush1.msra.mxu0 0.0
    %170 = vmatprep.subr.mxu0 0.0
    %171 = vmatpush1.msra.mxu0 0.0
    %172 = vmatprep.subr.mxu0 0.0
    %173 = vmatpush1.msra.mxu0 0.0
    %174 = vmatprep.subr.mxu0 0.0
    %175 = vmatpush1.msra.mxu0 0.0
    %176 = vmatprep.subr.mxu0 0.0
    %177 = vmatpush1.msra.mxu0 0.0
    %178 = vmatprep.subr.mxu0 0.0
    %179 = vmatpush1.msra.mxu0 0.0
    %180 = vmatprep.subr.mxu0 0.0
    %181 = vmatpush1.msra.mxu0 0.0
    %182 = vmatprep.subr.mxu0 0.0
    %183 = vmatpush1.msra.mxu0 0.0
    %184 = vmatprep.subr.mxu0 0.0
    %185 = vmatpush1.msra.mxu0 0.0
    %186 = vmatprep.subr.mxu0 0.0
    %187 = vmatpush1.msra.mxu0 0.0
    %188 = vmatprep.subr.mxu0 0.0
    %189 = vmatpush1.msra.mxu0 0.0
    %190 = vmatprep.subr.mxu0 0.0
    %191 = vmatpush1.msra.mxu0 0.0
    %192 = vmatprep.subr.mxu0 0.0
    %193 = vmatpush1.msra.mxu0 0.0
    %194 = vmatprep.subr.mxu0 0.0
    %195 = vmatpush1.msra.mxu0 0.0
    %196 = vmatprep.subr.mxu0 0.0
    %197 = vmatpush1.msra.mxu0 0.0
    %198 = vmatprep.subr.mxu0 0.0
    %199 = vmatpush1.msra.mxu0 0.0
    %200 = vmatprep.subr.mxu0 0.0
    %201 = vmatpush1.msra.mxu0 0.0
    %202 = vmatprep.mubr.f32.mxu0 0.0
    %203 = vmatmul.mubr.f32.gmra.mrb[0].mxu0 %v136
    %v204 = vpop.f32.mrb[0].mxu0
    %v205 = vadd.f32 0.0, %v204
    %v206 = vpop.f32.mrb[0].mxu0
    %207 = vdwg.mxu0
    %v208 = vadd.f32 %v118, %v205
    %v209 = vxor.u32 %v208, 2147483648
    %v210 = vmul.f32 %v209, 1.442695
    %v211 = vpow.pop %v210
    %v212 = vadd.f32 %v211, 1.0
    %v213 = vrcp.pop %v212
    %v214 = vmul.f32 1.0, %v213
    %216 = vrot.lane.b32.xlu0 %v55, 64
    %v217 = vpop.permute.xlu0 %216
    %v219 = vadd.f32 %v205, %v217
    %221 = vrot.lane.b32.xlu0 %v219, 64
    %v222 = vpop.permute.xlu0 %221
    %v224 = vmul.f32 %v214, %v222
    %226 = vrot.lane.b32.xlu0 %v224, 64
    %v227 = vpop.permute.xlu0 %226
    %v229 = vadd.f32 %v118, %v227
    %v230 = vtanh.pop %v229
    %v231 = vsub.f32 1.0, %v214
    %233 = vrot.lane.b32.xlu0 %v230, 96
    %v234 = vpop.permute.xlu0 %233
    %v236 = vmul.f32 %v231, %v234
    %238 = vrot.lane.b32.xlu0 %v126, 32
    %v239 = vpop.permute.xlu0 %238
    %v241 = vmul.f32 %v214, %v239
    %v242 = vadd.f32 %v236, %v241
    %244 = vrot.lane.b32.xlu0 %v242, 96
    %v245 = vpop.permute.xlu0 %244
    %v247 = vsel %vm132, %v245, %v130
    %v249 = vsel %vm134, %v247, 0
    %251 = vmatprep.subr.mxu0 %v29
    %252 = vmatpush1.msra.mxu0 %v28
    %253 = vmatprep.subr.mxu0 %v32
    %254 = vmatpush1.msra.mxu0 %v31
    %255 = vmatprep.subr.mxu0 %v35
    %256 = vmatpush1.msra.mxu0 %v34
    %257 = vmatprep.subr.mxu0 %v38
    %258 = vmatpush1.msra.mxu0 %v37
    %259 = vmatprep.subr.mxu0 %v41
    %260 = vmatpush1.msra.mxu0 %v40
    %261 = vmatprep.subr.mxu0 %v44
    %262 = vmatpush1.msra.mxu0 %v43
    %263 = vmatprep.subr.mxu0 %v47
    %264 = vmatpush1.msra.mxu0 %v46
    %265 = vmatprep.subr.mxu0 %v50
    %266 = vmatpush1.msra.mxu0 %v49
    %267 = vmatprep.subr.mxu0 0.0
    %268 = vmatpush1.msra.mxu0 0.0
    %269 = vmatprep.subr.mxu0 0.0
    %270 = vmatpush1.msra.mxu0 0.0
    %271 = vmatprep.subr.mxu0 0.0
    %272 = vmatpush1.msra.mxu0 0.0
    %273 = vmatprep.subr.mxu0 0.0
    %274 = vmatpush1.msra.mxu0 0.0
    %275 = vmatprep.subr.mxu0 0.0
    %276 = vmatpush1.msra.mxu0 0.0
    %277 = vmatprep.subr.mxu0 0.0
    %278 = vmatpush1.msra.mxu0 0.0
    %279 = vmatprep.subr.mxu0 0.0
    %280 = vmatpush1.msra.mxu0 0.0
    %281 = vmatprep.subr.mxu0 0.0
    %282 = vmatpush1.msra.mxu0 0.0
    %283 = vmatprep.subr.mxu0 0.0
    %284 = vmatpush1.msra.mxu0 0.0
    %285 = vmatprep.subr.mxu0 0.0
    %286 = vmatpush1.msra.mxu0 0.0
    %287 = vmatprep.subr.mxu0 0.0
    %288 = vmatpush1.msra.mxu0 0.0
    %289 = vmatprep.subr.mxu0 0.0
    %290 = vmatpush1.msra.mxu0 0.0
    %291 = vmatprep.subr.mxu0 0.0
    %292 = vmatpush1.msra.mxu0 0.0
    %293 = vmatprep.subr.mxu0 0.0
    %294 = vmatpush1.msra.mxu0 0.0
    %295 = vmatprep.subr.mxu0 0.0
    %296 = vmatpush1.msra.mxu0 0.0
    %297 = vmatprep.subr.mxu0 0.0
    %298 = vmatpush1.msra.mxu0 0.0
    %299 = vmatprep.subr.mxu0 0.0
    %300 = vmatpush1.msra.mxu0 0.0
    %301 = vmatprep.subr.mxu0 0.0
    %302 = vmatpush1.msra.mxu0 0.0
    %303 = vmatprep.subr.mxu0 0.0
    %304 = vmatpush1.msra.mxu0 0.0
    %305 = vmatprep.subr.mxu0 0.0
    %306 = vmatpush1.msra.mxu0 0.0
    %307 = vmatprep.subr.mxu0 0.0
    %308 = vmatpush1.msra.mxu0 0.0
    %309 = vmatprep.subr.mxu0 0.0
    %310 = vmatpush1.msra.mxu0 0.0
    %311 = vmatprep.subr.mxu0 0.0
    %312 = vmatpush1.msra.mxu0 0.0
    %313 = vmatprep.subr.mxu0 0.0
    %314 = vmatpush1.msra.mxu0 0.0
    %315 = vmatprep.mubr.f32.mxu0 0.0
    %316 = vmatmul.mubr.f32.gmra.mrb[0].mxu0 %v249
    %v317 = vpop.f32.mrb[0].mxu0
    %v318 = vadd.f32 0.0, %v317
    %v319 = vpop.f32.mrb[0].mxu0
    %v320 = vadd.f32 0.0, %v319
    %321 = vdwg.mxu0
    %322 = vmatprep.subr.mxu0 0.0
    %323 = vmatpush1.msra.mxu0 %v30
    %324 = vmatprep.subr.mxu0 0.0
    %325 = vmatpush1.msra.mxu0 %v33
    %326 = vmatprep.subr.mxu0 0.0
    %327 = vmatpush1.msra.mxu0 %v36
    %328 = vmatprep.subr.mxu0 0.0
    %329 = vmatpush1.msra.mxu0 %v39
    %330 = vmatprep.subr.mxu0 0.0
    %331 = vmatpush1.msra.mxu0 %v42
    %332 = vmatprep.subr.mxu0 0.0
    %333 = vmatpush1.msra.mxu0 %v45
    %334 = vmatprep.subr.mxu0 0.0
    %335 = vmatpush1.msra.mxu0 %v48
    %336 = vmatprep.subr.mxu0 0.0
    %337 = vmatpush1.msra.mxu0 %v51
    %338 = vmatprep.subr.mxu0 0.0
    %339 = vmatpush1.msra.mxu0 0.0
    %340 = vmatprep.subr.mxu0 0.0
    %341 = vmatpush1.msra.mxu0 0.0
    %342 = vmatprep.subr.mxu0 0.0
    %343 = vmatpush1.msra.mxu0 0.0
    %344 = vmatprep.subr.mxu0 0.0
    %345 = vmatpush1.msra.mxu0 0.0
    %346 = vmatprep.subr.mxu0 0.0
    %347 = vmatpush1.msra.mxu0 0.0
    %348 = vmatprep.subr.mxu0 0.0
    %349 = vmatpush1.msra.mxu0 0.0
    %350 = vmatprep.subr.mxu0 0.0
    %351 = vmatpush1.msra.mxu0 0.0
    %352 = vmatprep.subr.mxu0 0.0
    %353 = vmatpush1.msra.mxu0 0.0
    %354 = vmatprep.subr.mxu0 0.0
    %355 = vmatpush1.msra.mxu0 0.0
    %356 = vmatprep.subr.mxu0 0.0
    %357 = vmatpush1.msra.mxu0 0.0
    %358 = vmatprep.subr.mxu0 0.0
    %359 = vmatpush1.msra.mxu0 0.0
    %360 = vmatprep.subr.mxu0 0.0
    %361 = vmatpush1.msra.mxu0 0.0
    %362 = vmatprep.subr.mxu0 0.0
    %363 = vmatpush1.msra.mxu0 0.0
    %364 = vmatprep.subr.mxu0 0.0
    %365 = vmatpush1.msra.mxu0 0.0
    %366 = vmatprep.subr.mxu0 0.0
    %367 = vmatpush1.msra.mxu0 0.0
    %368 = vmatprep.subr.mxu0 0.0
    %369 = vmatpush1.msra.mxu0 0.0
    %370 = vmatprep.subr.mxu0 0.0
    %371 = vmatpush1.msra.mxu0 0.0
    %372 = vmatprep.subr.mxu0 0.0
    %373 = vmatpush1.msra.mxu0 0.0
    %374 = vmatprep.subr.mxu0 0.0
    %375 = vmatpush1.msra.mxu0 0.0
    %376 = vmatprep.subr.mxu0 0.0
    %377 = vmatpush1.msra.mxu0 0.0
    %378 = vmatprep.subr.mxu0 0.0
    %379 = vmatpush1.msra.mxu0 0.0
    %380 = vmatprep.subr.mxu0 0.0
    %381 = vmatpush1.msra.mxu0 0.0
    %382 = vmatprep.subr.mxu0 0.0
    %383 = vmatpush1.msra.mxu0 0.0
    %384 = vmatprep.subr.mxu0 0.0
    %385 = vmatpush1.msra.mxu0 0.0
    %386 = vmatprep.mubr.f32.mxu0 0.0
    %387 = vmatmul.mubr.f32.gmra.mrb[0].mxu0 %v249
    %v388 = vpop.f32.mrb[0].mxu0
    %v389 = vadd.f32 0.0, %v388
    %v390 = vpop.f32.mrb[0].mxu0
    %391 = vdwg.mxu0
    %v392 = vadd.f32 %v119, %v318
    %v393 = vxor.u32 %v392, 2147483648
    %v394 = vmul.f32 %v393, 1.442695
    %v395 = vpow.pop %v394
    %v396 = vadd.f32 %v395, 1.0
    %v397 = vrcp.pop %v396
    %v398 = vmul.f32 1.0, %v397
    %v399 = vadd.f32 %v318, %v217
    %401 = vrot.lane.b32.xlu0 %v399, 64
    %v402 = vpop.permute.xlu0 %401
    %v404 = vmul.f32 %v398, %v402
    %406 = vrot.lane.b32.xlu0 %v404, 64
    %v407 = vpop.permute.xlu0 %406
    %v409 = vadd.f32 %v119, %v407
    %v410 = vtanh.pop %v409
    %v411 = vsub.f32 1.0, %v398
    %413 = vrot.lane.b32.xlu0 %v410, 96
    %v414 = vpop.permute.xlu0 %413
    %v416 = vmul.f32 %v411, %v414
    %v417 = vmul.f32 %v398, %v242
    %v418 = vadd.f32 %v416, %v417
    %v419 = vadd.f32 %v389, %v54
    %v420 = vadd.f32 %v419, %v320
    %v421 = vxor.u32 %v420, 2147483648
    %v422 = vmul.f32 %v421, 1.442695
    %v423 = vpow.pop %v422
    %v424 = vadd.f32 %v423, 1.0
    %v425 = vrcp.pop %v424
    %v426 = vmul.f32 1.0, %v425
    %428 = vrot.lane.b32.xlu0 %v56, 64
    %v429 = vpop.permute.xlu0 %428
    %v431 = vadd.f32 %v320, %v429
    %433 = vrot.lane.b32.xlu0 %v431, 64
    %v434 = vpop.permute.xlu0 %433
    %v436 = vmul.f32 %v426, %v434
    %438 = vrot.lane.b32.xlu0 %v436, 64
    %v439 = vpop.permute.xlu0 %438
    %v441 = vadd.f32 %v419, %v439
    %v442 = vtanh.pop %v441
    %v443 = vsub.f32 1.0, %v426
    %445 = vrot.lane.b32.xlu0 %v442, 96
    %v446 = vpop.permute.xlu0 %445
    %v448 = vmul.f32 %v443, %v446
    %v449 = vmul.f32 %v426, %v130
    %v450 = vadd.f32 %v448, %v449
    %452 = vrot.lane.b32.xlu0 %v450, 96
    %v453 = vpop.permute.xlu0 %452
    %455 = vst.msk [vmem:[#allocation2] sm:$0xff] %vm132, %v453
    %457 = vrot.lane.b32.xlu0 %v418, 96
    %v458 = vpop.permute.xlu0 %457
    %v460 = vsel %vm132, %v458, %v450
    %v462 = vsel %vm134, %v460, 0
    %464 = vmatprep.subr.mxu0 %v29
    %465 = vmatpush1.msra.mxu0 %v28
    %466 = vmatprep.subr.mxu0 %v32
    %467 = vmatpush1.msra.mxu0 %v31
    %468 = vmatprep.subr.mxu0 %v35
    %469 = vmatpush1.msra.mxu0 %v34
    %470 = vmatprep.subr.mxu0 %v38
    %471 = vmatpush1.msra.mxu0 %v37
    %472 = vmatprep.subr.mxu0 %v41
    %473 = vmatpush1.msra.mxu0 %v40
    %474 = vmatprep.subr.mxu0 %v44
    %475 = vmatpush1.msra.mxu0 %v43
    %476 = vmatprep.subr.mxu0 %v47
    %477 = vmatpush1.msra.mxu0 %v46
    %478 = vmatprep.subr.mxu0 %v50
    %479 = vmatpush1.msra.mxu0 %v49
    %480 = vmatprep.subr.mxu0 0.0
    %481 = vmatpush1.msra.mxu0 0.0
    %482 = vmatprep.subr.mxu0 0.0
    %483 = vmatpush1.msra.mxu0 0.0
    %484 = vmatprep.subr.mxu0 0.0
    %485 = vmatpush1.msra.mxu0 0.0
    %486 = vmatprep.subr.mxu0 0.0
    %487 = vmatpush1.msra.mxu0 0.0
    %488 = vmatprep.subr.mxu0 0.0
    %489 = vmatpush1.msra.mxu0 0.0
    %490 = vmatprep.subr.mxu0 0.0
    %491 = vmatpush1.msra.mxu0 0.0
    %492 = vmatprep.subr.mxu0 0.0
    %493 = vmatpush1.msra.mxu0 0.0
    %494 = vmatprep.subr.mxu0 0.0
    %495 = vmatpush1.msra.mxu0 0.0
    %496 = vmatprep.subr.mxu0 0.0
    %497 = vmatpush1.msra.mxu0 0.0
    %498 = vmatprep.subr.mxu0 0.0
    %499 = vmatpush1.msra.mxu0 0.0
    %500 = vmatprep.subr.mxu0 0.0
    %501 = vmatpush1.msra.mxu0 0.0
    %502 = vmatprep.subr.mxu0 0.0
    %503 = vmatpush1.msra.mxu0 0.0
    %504 = vmatprep.subr.mxu0 0.0
    %505 = vmatpush1.msra.mxu0 0.0
    %506 = vmatprep.subr.mxu0 0.0
    %507 = vmatpush1.msra.mxu0 0.0
    %508 = vmatprep.subr.mxu0 0.0
    %509 = vmatpush1.msra.mxu0 0.0
    %510 = vmatprep.subr.mxu0 0.0
    %511 = vmatpush1.msra.mxu0 0.0
    %512 = vmatprep.subr.mxu0 0.0
    %513 = vmatpush1.msra.mxu0 0.0
    %514 = vmatprep.subr.mxu0 0.0
    %515 = vmatpush1.msra.mxu0 0.0
    %516 = vmatprep.subr.mxu0 0.0
    %517 = vmatpush1.msra.mxu0 0.0
    %518 = vmatprep.subr.mxu0 0.0
    %519 = vmatpush1.msra.mxu0 0.0
    %520 = vmatprep.subr.mxu0 0.0
    %521 = vmatpush1.msra.mxu0 0.0
    %522 = vmatprep.subr.mxu0 0.0
    %523 = vmatpush1.msra.mxu0 0.0
    %524 = vmatprep.subr.mxu0 0.0
    %525 = vmatpush1.msra.mxu0 0.0
    %526 = vmatprep.subr.mxu0 0.0
    %527 = vmatpush1.msra.mxu0 0.0
    %528 = vmatprep.mubr.f32.mxu0 0.0
    %529 = vmatmul.mubr.f32.gmra.mrb[0].mxu0 %v462
    %v530 = vpop.f32.mrb[0].mxu0
    %v531 = vadd.f32 0.0, %v530
    %v532 = vpop.f32.mrb[0].mxu0
    %v533 = vadd.f32 0.0, %v532
    %534 = vdwg.mxu0
    %535 = vmatprep.subr.mxu0 0.0
    %536 = vmatpush1.msra.mxu0 %v30
    %537 = vmatprep.subr.mxu0 0.0
    %538 = vmatpush1.msra.mxu0 %v33
    %539 = vmatprep.subr.mxu0 0.0
    %540 = vmatpush1.msra.mxu0 %v36
    %541 = vmatprep.subr.mxu0 0.0
    %542 = vmatpush1.msra.mxu0 %v39
    %543 = vmatprep.subr.mxu0 0.0
    %544 = vmatpush1.msra.mxu0 %v42
    %545 = vmatprep.subr.mxu0 0.0
    %546 = vmatpush1.msra.mxu0 %v45
    %547 = vmatprep.subr.mxu0 0.0
    %548 = vmatpush1.msra.mxu0 %v48
    %549 = vmatprep.subr.mxu0 0.0
    %550 = vmatpush1.msra.mxu0 %v51
    %551 = vmatprep.subr.mxu0 0.0
    %552 = vmatpush1.msra.mxu0 0.0
    %553 = vmatprep.subr.mxu0 0.0
    %554 = vmatpush1.msra.mxu0 0.0
    %555 = vmatprep.subr.mxu0 0.0
    %556 = vmatpush1.msra.mxu0 0.0
    %557 = vmatprep.subr.mxu0 0.0
    %558 = vmatpush1.msra.mxu0 0.0
    %559 = vmatprep.subr.mxu0 0.0
    %560 = vmatpush1.msra.mxu0 0.0
    %561 = vmatprep.subr.mxu0 0.0
    %562 = vmatpush1.msra.mxu0 0.0
    %563 = vmatprep.subr.mxu0 0.0
    %564 = vmatpush1.msra.mxu0 0.0
    %565 = vmatprep.subr.mxu0 0.0
    %566 = vmatpush1.msra.mxu0 0.0
    %567 = vmatprep.subr.mxu0 0.0
    %568 = vmatpush1.msra.mxu0 0.0
    %569 = vmatprep.subr.mxu0 0.0
    %570 = vmatpush1.msra.mxu0 0.0
    %571 = vmatprep.subr.mxu0 0.0
    %572 = vmatpush1.msra.mxu0 0.0
    %573 = vmatprep.subr.mxu0 0.0
    %574 = vmatpush1.msra.mxu0 0.0
    %575 = vmatprep.subr.mxu0 0.0
    %576 = vmatpush1.msra.mxu0 0.0
    %577 = vmatprep.subr.mxu0 0.0
    %578 = vmatpush1.msra.mxu0 0.0
    %579 = vmatprep.subr.mxu0 0.0
    %580 = vmatpush1.msra.mxu0 0.0
    %581 = vmatprep.subr.mxu0 0.0
    %582 = vmatpush1.msra.mxu0 0.0
    %583 = vmatprep.subr.mxu0 0.0
    %584 = vmatpush1.msra.mxu0 0.0
    %585 = vmatprep.subr.mxu0 0.0
    %586 = vmatpush1.msra.mxu0 0.0
    %587 = vmatprep.subr.mxu0 0.0
    %588 = vmatpush1.msra.mxu0 0.0
    %589 = vmatprep.subr.mxu0 0.0
    %590 = vmatpush1.msra.mxu0 0.0
    %591 = vmatprep.subr.mxu0 0.0
    %592 = vmatpush1.msra.mxu0 0.0
    %593 = vmatprep.subr.mxu0 0.0
    %594 = vmatpush1.msra.mxu0 0.0
    %595 = vmatprep.subr.mxu0 0.0
    %596 = vmatpush1.msra.mxu0 0.0
    %597 = vmatprep.subr.mxu0 0.0
    %598 = vmatpush1.msra.mxu0 0.0
    %599 = vmatprep.mubr.f32.mxu0 0.0
    %600 = vmatmul.mubr.f32.gmra.mrb[0].mxu0 %v462
    %v601 = vpop.f32.mrb[0].mxu0
    %v602 = vadd.f32 0.0, %v601
    %v603 = vpop.f32.mrb[0].mxu0
    %604 = vdwg.mxu0
    %v605 = vadd.f32 %v120, %v531
    %v606 = vxor.u32 %v605, 2147483648
    %v607 = vmul.f32 %v606, 1.442695
    %v608 = vpow.pop %v607
    %v609 = vadd.f32 %v608, 1.0
    %v610 = vrcp.pop %v609
    %v611 = vmul.f32 1.0, %v610
    %v612 = vadd.f32 %v531, %v217
    %614 = vrot.lane.b32.xlu0 %v612, 64
    %v615 = vpop.permute.xlu0 %614
    %v617 = vmul.f32 %v611, %v615
    %619 = vrot.lane.b32.xlu0 %v617, 64
    %v620 = vpop.permute.xlu0 %619
    %v622 = vadd.f32 %v120, %v620
    %v623 = vtanh.pop %v622
    %v624 = vsub.f32 1.0, %v611
    %626 = vrot.lane.b32.xlu0 %v623, 96
    %v627 = vpop.permute.xlu0 %626
    %v629 = vmul.f32 %v624, %v627
    %v630 = vmul.f32 %v611, %v418
    %v631 = vadd.f32 %v629, %v630
    %v632 = vadd.f32 %v602, %v54
    %v633 = vadd.f32 %v632, %v533
    %v634 = vxor.u32 %v633, 2147483648
    %v635 = vmul.f32 %v634, 1.442695
    %v636 = vpow.pop %v635
    %v637 = vadd.f32 %v636, 1.0
    %v638 = vrcp.pop %v637
    %v639 = vmul.f32 1.0, %v638
    %v640 = vadd.f32 %v533, %v429
    %642 = vrot.lane.b32.xlu0 %v640, 64
    %v643 = vpop.permute.xlu0 %642
    %v645 = vmul.f32 %v639, %v643
    %647 = vrot.lane.b32.xlu0 %v645, 64
    %v648 = vpop.permute.xlu0 %647
    %v650 = vadd.f32 %v632, %v648
    %v651 = vtanh.pop %v650
    %v652 = vsub.f32 1.0, %v639
    %654 = vrot.lane.b32.xlu0 %v651, 96
    %v655 = vpop.permute.xlu0 %654
    %v657 = vmul.f32 %v652, %v655
    %v658 = vmul.f32 %v639, %v450
    %v659 = vadd.f32 %v657, %v658
    %661 = vrot.lane.b32.xlu0 %v659, 96
    %v662 = vpop.permute.xlu0 %661
    %664 = vst.msk [vmem:[#allocation2 + $0x8] sm:$0xff] %vm132, %v662
    %666 = vrot.lane.b32.xlu0 %v631, 96
    %v667 = vpop.permute.xlu0 %666
    %v669 = vsel %vm132, %v667, %v659
    %v671 = vsel %vm134, %v669, 0
    %673 = vmatprep.subr.mxu0 %v29
    %674 = vmatpush1.msra.mxu0 %v28
    %675 = vmatprep.subr.mxu0 %v32
    %676 = vmatpush1.msra.mxu0 %v31
    %677 = vmatprep.subr.mxu0 %v35
    %678 = vmatpush1.msra.mxu0 %v34
    %679 = vmatprep.subr.mxu0 %v38
    %680 = vmatpush1.msra.mxu0 %v37
    %681 = vmatprep.subr.mxu0 %v41
    %682 = vmatpush1.msra.mxu0 %v40
    %683 = vmatprep.subr.mxu0 %v44
    %684 = vmatpush1.msra.mxu0 %v43
    %685 = vmatprep.subr.mxu0 %v47
    %686 = vmatpush1.msra.mxu0 %v46
    %687 = vmatprep.subr.mxu0 %v50
    %688 = vmatpush1.msra.mxu0 %v49
    %689 = vmatprep.subr.mxu0 0.0
    %690 = vmatpush1.msra.mxu0 0.0
    %691 = vmatprep.subr.mxu0 0.0
    %692 = vmatpush1.msra.mxu0 0.0
    %693 = vmatprep.subr.mxu0 0.0
    %694 = vmatpush1.msra.mxu0 0.0
    %695 = vmatprep.subr.mxu0 0.0
    %696 = vmatpush1.msra.mxu0 0.0
    %697 = vmatprep.subr.mxu0 0.0
    %698 = vmatpush1.msra.mxu0 0.0
    %699 = vmatprep.subr.mxu0 0.0
    %700 = vmatpush1.msra.mxu0 0.0
    %701 = vmatprep.subr.mxu0 0.0
    %702 = vmatpush1.msra.mxu0 0.0
    %703 = vmatprep.subr.mxu0 0.0
    %704 = vmatpush1.msra.mxu0 0.0
    %705 = vmatprep.subr.mxu0 0.0
    %706 = vmatpush1.msra.mxu0 0.0
    %707 = vmatprep.subr.mxu0 0.0
    %708 = vmatpush1.msra.mxu0 0.0
    %709 = vmatprep.subr.mxu0 0.0
    %710 = vmatpush1.msra.mxu0 0.0
    %711 = vmatprep.subr.mxu0 0.0
    %712 = vmatpush1.msra.mxu0 0.0
    %713 = vmatprep.subr.mxu0 0.0
    %714 = vmatpush1.msra.mxu0 0.0
    %715 = vmatprep.subr.mxu0 0.0
    %716 = vmatpush1.msra.mxu0 0.0
    %717 = vmatprep.subr.mxu0 0.0
    %718 = vmatpush1.msra.mxu0 0.0
    %719 = vmatprep.subr.mxu0 0.0
    %720 = vmatpush1.msra.mxu0 0.0
    %721 = vmatprep.subr.mxu0 0.0
    %722 = vmatpush1.msra.mxu0 0.0
    %723 = vmatprep.subr.mxu0 0.0
    %724 = vmatpush1.msra.mxu0 0.0
    %725 = vmatprep.subr.mxu0 0.0
    %726 = vmatpush1.msra.mxu0 0.0
    %727 = vmatprep.subr.mxu0 0.0
    %728 = vmatpush1.msra.mxu0 0.0
    %729 = vmatprep.subr.mxu0 0.0
    %730 = vmatpush1.msra.mxu0 0.0
    %731 = vmatprep.subr.mxu0 0.0
    %732 = vmatpush1.msra.mxu0 0.0
    %733 = vmatprep.subr.mxu0 0.0
    %734 = vmatpush1.msra.mxu0 0.0
    %735 = vmatprep.subr.mxu0 0.0
    %736 = vmatpush1.msra.mxu0 0.0
    %737 = vmatprep.mubr.f32.mxu0 0.0
    %738 = vmatmul.mubr.f32.gmra.mrb[0].mxu0 %v671
    %v739 = vpop.f32.mrb[0].mxu0
    %v740 = vadd.f32 0.0, %v739
    %v741 = vpop.f32.mrb[0].mxu0
    %v742 = vadd.f32 0.0, %v741
    %743 = vdwg.mxu0
    %744 = vmatprep.subr.mxu0 0.0
    %745 = vmatpush1.msra.mxu0 %v30
    %746 = vmatprep.subr.mxu0 0.0
    %747 = vmatpush1.msra.mxu0 %v33
    %748 = vmatprep.subr.mxu0 0.0
    %749 = vmatpush1.msra.mxu0 %v36
    %750 = vmatprep.subr.mxu0 0.0
    %751 = vmatpush1.msra.mxu0 %v39
    %752 = vmatprep.subr.mxu0 0.0
    %753 = vmatpush1.msra.mxu0 %v42
    %754 = vmatprep.subr.mxu0 0.0
    %755 = vmatpush1.msra.mxu0 %v45
    %756 = vmatprep.subr.mxu0 0.0
    %757 = vmatpush1.msra.mxu0 %v48
    %758 = vmatprep.subr.mxu0 0.0
    %759 = vmatpush1.msra.mxu0 %v51
    %760 = vmatprep.subr.mxu0 0.0
    %761 = vmatpush1.msra.mxu0 0.0
    %762 = vmatprep.subr.mxu0 0.0
    %763 = vmatpush1.msra.mxu0 0.0
    %764 = vmatprep.subr.mxu0 0.0
    %765 = vmatpush1.msra.mxu0 0.0
    %766 = vmatprep.subr.mxu0 0.0
    %767 = vmatpush1.msra.mxu0 0.0
    %768 = vmatprep.subr.mxu0 0.0
    %769 = vmatpush1.msra.mxu0 0.0
    %770 = vmatprep.subr.mxu0 0.0
    %771 = vmatpush1.msra.mxu0 0.0
    %772 = vmatprep.subr.mxu0 0.0
    %773 = vmatpush1.msra.mxu0 0.0
    %774 = vmatprep.subr.mxu0 0.0
    %775 = vmatpush1.msra.mxu0 0.0
    %776 = vmatprep.subr.mxu0 0.0
    %777 = vmatpush1.msra.mxu0 0.0
    %778 = vmatprep.subr.mxu0 0.0
    %779 = vmatpush1.msra.mxu0 0.0
    %780 = vmatprep.subr.mxu0 0.0
    %781 = vmatpush1.msra.mxu0 0.0
    %782 = vmatprep.subr.mxu0 0.0
    %783 = vmatpush1.msra.mxu0 0.0
    %784 = vmatprep.subr.mxu0 0.0
    %785 = vmatpush1.msra.mxu0 0.0
    %786 = vmatprep.subr.mxu0 0.0
    %787 = vmatpush1.msra.mxu0 0.0
    %788 = vmatprep.subr.mxu0 0.0
    %789 = vmatpush1.msra.mxu0 0.0
    %790 = vmatprep.subr.mxu0 0.0
    %791 = vmatpush1.msra.mxu0 0.0
    %792 = vmatprep.subr.mxu0 0.0
    %793 = vmatpush1.msra.mxu0 0.0
    %794 = vmatprep.subr.mxu0 0.0
    %795 = vmatpush1.msra.mxu0 0.0
    %796 = vmatprep.subr.mxu0 0.0
    %797 = vmatpush1.msra.mxu0 0.0
    %798 = vmatprep.subr.mxu0 0.0
    %799 = vmatpush1.msra.mxu0 0.0
    %800 = vmatprep.subr.mxu0 0.0
    %801 = vmatpush1.msra.mxu0 0.0
    %802 = vmatprep.subr.mxu0 0.0
    %803 = vmatpush1.msra.mxu0 0.0
    %804 = vmatprep.subr.mxu0 0.0
    %805 = vmatpush1.msra.mxu0 0.0
    %806 = vmatprep.subr.mxu0 0.0
    %807 = vmatpush1.msra.mxu0 0.0
    %808 = vmatprep.mubr.f32.mxu0 0.0
    %809 = vmatmul.mubr.f32.gmra.mrb[0].mxu0 %v671
    %v810 = vpop.f32.mrb[0].mxu0
    %v811 = vadd.f32 0.0, %v810
    %v812 = vpop.f32.mrb[0].mxu0
    %813 = vdwg.mxu0
    %v814 = vadd.f32 %v121, %v740
    %v815 = vxor.u32 %v814, 2147483648
    %v816 = vmul.f32 %v815, 1.442695
    %v817 = vpow.pop %v816
    %v818 = vadd.f32 %v817, 1.0
    %v819 = vrcp.pop %v818
    %v820 = vmul.f32 1.0, %v819
    %v821 = vadd.f32 %v740, %v217
    %823 = vrot.lane.b32.xlu0 %v821, 64
    %v824 = vpop.permute.xlu0 %823
    %v826 = vmul.f32 %v820, %v824
    %828 = vrot.lane.b32.xlu0 %v826, 64
    %v829 = vpop.permute.xlu0 %828
    %v831 = vadd.f32 %v121, %v829
    %v832 = vtanh.pop %v831
    %v833 = vsub.f32 1.0, %v820
    %835 = vrot.lane.b32.xlu0 %v832, 96
    %v836 = vpop.permute.xlu0 %835
    %v838 = vmul.f32 %v833, %v836
    %v839 = vmul.f32 %v820, %v631
    %v840 = vadd.f32 %v838, %v839
    %v841 = vadd.f32 %v811, %v54
    %v842 = vadd.f32 %v841, %v742
    %v843 = vxor.u32 %v842, 2147483648
    %v844 = vmul.f32 %v843, 1.442695
    %v845 = vpow.pop %v844
    %v846 = vadd.f32 %v845, 1.0
    %v847 = vrcp.pop %v846
    %v848 = vmul.f32 1.0, %v847
    %v849 = vadd.f32 %v742, %v429
    %851 = vrot.lane.b32.xlu0 %v849, 64
    %v852 = vpop.permute.xlu0 %851
    %v854 = vmul.f32 %v848, %v852
    %856 = vrot.lane.b32.xlu0 %v854, 64
    %v857 = vpop.permute.xlu0 %856
    %v859 = vadd.f32 %v841, %v857
    %v860 = vtanh.pop %v859
    %v861 = vsub.f32 1.0, %v848
    %863 = vrot.lane.b32.xlu0 %v860, 96
    %v864 = vpop.permute.xlu0 %863
    %v866 = vmul.f32 %v861, %v864
    %v867 = vmul.f32 %v848, %v659
    %v868 = vadd.f32 %v866, %v867
    %870 = vrot.lane.b32.xlu0 %v868, 96
    %v871 = vpop.permute.xlu0 %870
    %873 = vst.msk [vmem:[#allocation2 + $0x10] sm:$0xff] %vm132, %v871
    %875 = vrot.lane.b32.xlu0 %v840, 96
    %v876 = vpop.permute.xlu0 %875
    %v878 = vsel %vm132, %v876, %v868
    %v880 = vsel %vm134, %v878, 0
    %882 = vmatprep.subr.mxu0 %v29
    %883 = vmatpush1.msra.mxu0 %v28
    %884 = vmatprep.subr.mxu0 %v32
    %885 = vmatpush1.msra.mxu0 %v31
    %886 = vmatprep.subr.mxu0 %v35
    %887 = vmatpush1.msra.mxu0 %v34
    %888 = vmatprep.subr.mxu0 %v38
    %889 = vmatpush1.msra.mxu0 %v37
    %890 = vmatprep.subr.mxu0 %v41
    %891 = vmatpush1.msra.mxu0 %v40
    %892 = vmatprep.subr.mxu0 %v44
    %893 = vmatpush1.msra.mxu0 %v43
    %894 = vmatprep.subr.mxu0 %v47
    %895 = vmatpush1.msra.mxu0 %v46
    %896 = vmatprep.subr.mxu0 %v50
    %897 = vmatpush1.msra.mxu0 %v49
    %898 = vmatprep.subr.mxu0 0.0
    %899 = vmatpush1.msra.mxu0 0.0
    %900 = vmatprep.subr.mxu0 0.0
    %901 = vmatpush1.msra.mxu0 0.0
    %902 = vmatprep.subr.mxu0 0.0
    %903 = vmatpush1.msra.mxu0 0.0
    %904 = vmatprep.subr.mxu0 0.0
    %905 = vmatpush1.msra.mxu0 0.0
    %906 = vmatprep.subr.mxu0 0.0
    %907 = vmatpush1.msra.mxu0 0.0
    %908 = vmatprep.subr.mxu0 0.0
    %909 = vmatpush1.msra.mxu0 0.0
    %910 = vmatprep.subr.mxu0 0.0
    %911 = vmatpush1.msra.mxu0 0.0
    %912 = vmatprep.subr.mxu0 0.0
    %913 = vmatpush1.msra.mxu0 0.0
    %914 = vmatprep.subr.mxu0 0.0
    %915 = vmatpush1.msra.mxu0 0.0
    %916 = vmatprep.subr.mxu0 0.0
    %917 = vmatpush1.msra.mxu0 0.0
    %918 = vmatprep.subr.mxu0 0.0
    %919 = vmatpush1.msra.mxu0 0.0
    %920 = vmatprep.subr.mxu0 0.0
    %921 = vmatpush1.msra.mxu0 0.0
    %922 = vmatprep.subr.mxu0 0.0
    %923 = vmatpush1.msra.mxu0 0.0
    %924 = vmatprep.subr.mxu0 0.0
    %925 = vmatpush1.msra.mxu0 0.0
    %926 = vmatprep.subr.mxu0 0.0
    %927 = vmatpush1.msra.mxu0 0.0
    %928 = vmatprep.subr.mxu0 0.0
    %929 = vmatpush1.msra.mxu0 0.0
    %930 = vmatprep.subr.mxu0 0.0
    %931 = vmatpush1.msra.mxu0 0.0
    %932 = vmatprep.subr.mxu0 0.0
    %933 = vmatpush1.msra.mxu0 0.0
    %934 = vmatprep.subr.mxu0 0.0
    %935 = vmatpush1.msra.mxu0 0.0
    %936 = vmatprep.subr.mxu0 0.0
    %937 = vmatpush1.msra.mxu0 0.0
    %938 = vmatprep.subr.mxu0 0.0
    %939 = vmatpush1.msra.mxu0 0.0
    %940 = vmatprep.subr.mxu0 0.0
    %941 = vmatpush1.msra.mxu0 0.0
    %942 = vmatprep.subr.mxu0 0.0
    %943 = vmatpush1.msra.mxu0 0.0
    %944 = vmatprep.subr.mxu0 0.0
    %945 = vmatpush1.msra.mxu0 0.0
    %946 = vmatprep.mubr.f32.mxu0 0.0
    %947 = vmatmul.mubr.f32.gmra.mrb[0].mxu0 %v880
    %v948 = vpop.f32.mrb[0].mxu0
    %v949 = vadd.f32 0.0, %v948
    %v950 = vpop.f32.mrb[0].mxu0
    %v951 = vadd.f32 0.0, %v950
    %952 = vdwg.mxu0
    %953 = vmatprep.subr.mxu0 0.0
    %954 = vmatpush1.msra.mxu0 %v30
    %955 = vmatprep.subr.mxu0 0.0
    %956 = vmatpush1.msra.mxu0 %v33
    %957 = vmatprep.subr.mxu0 0.0
    %958 = vmatpush1.msra.mxu0 %v36
    %959 = vmatprep.subr.mxu0 0.0
    %960 = vmatpush1.msra.mxu0 %v39
    %961 = vmatprep.subr.mxu0 0.0
    %962 = vmatpush1.msra.mxu0 %v42
    %963 = vmatprep.subr.mxu0 0.0
    %964 = vmatpush1.msra.mxu0 %v45
    %965 = vmatprep.subr.mxu0 0.0
    %966 = vmatpush1.msra.mxu0 %v48
    %967 = vmatprep.subr.mxu0 0.0
    %968 = vmatpush1.msra.mxu0 %v51
    %969 = vmatprep.subr.mxu0 0.0
    %970 = vmatpush1.msra.mxu0 0.0
    %971 = vmatprep.subr.mxu0 0.0
    %972 = vmatpush1.msra.mxu0 0.0
    %973 = vmatprep.subr.mxu0 0.0
    %974 = vmatpush1.msra.mxu0 0.0
    %975 = vmatprep.subr.mxu0 0.0
    %976 = vmatpush1.msra.mxu0 0.0
    %977 = vmatprep.subr.mxu0 0.0
    %978 = vmatpush1.msra.mxu0 0.0
    %979 = vmatprep.subr.mxu0 0.0
    %980 = vmatpush1.msra.mxu0 0.0
    %981 = vmatprep.subr.mxu0 0.0
    %982 = vmatpush1.msra.mxu0 0.0
    %983 = vmatprep.subr.mxu0 0.0
    %984 = vmatpush1.msra.mxu0 0.0
    %985 = vmatprep.subr.mxu0 0.0
    %986 = vmatpush1.msra.mxu0 0.0
    %987 = vmatprep.subr.mxu0 0.0
    %988 = vmatpush1.msra.mxu0 0.0
    %989 = vmatprep.subr.mxu0 0.0
    %990 = vmatpush1.msra.mxu0 0.0
    %991 = vmatprep.subr.mxu0 0.0
    %992 = vmatpush1.msra.mxu0 0.0
    %993 = vmatprep.subr.mxu0 0.0
    %994 = vmatpush1.msra.mxu0 0.0
    %995 = vmatprep.subr.mxu0 0.0
    %996 = vmatpush1.msra.mxu0 0.0
    %997 = vmatprep.subr.mxu0 0.0
    %998 = vmatpush1.msra.mxu0 0.0
    %999 = vmatprep.subr.mxu0 0.0
    %1000 = vmatpush1.msra.mxu0 0.0
    %1001 = vmatprep.subr.mxu0 0.0
    %1002 = vmatpush1.msra.mxu0 0.0
    %1003 = vmatprep.subr.mxu0 0.0
    %1004 = vmatpush1.msra.mxu0 0.0
    %1005 = vmatprep.subr.mxu0 0.0
    %1006 = vmatpush1.msra.mxu0 0.0
    %1007 = vmatprep.subr.mxu0 0.0
    %1008 = vmatpush1.msra.mxu0 0.0
    %1009 = vmatprep.subr.mxu0 0.0
    %1010 = vmatpush1.msra.mxu0 0.0
    %1011 = vmatprep.subr.mxu0 0.0
    %1012 = vmatpush1.msra.mxu0 0.0
    %1013 = vmatprep.subr.mxu0 0.0
    %1014 = vmatpush1.msra.mxu0 0.0
    %1015 = vmatprep.subr.mxu0 0.0
    %1016 = vmatpush1.msra.mxu0 0.0
    %1017 = vmatprep.mubr.f32.mxu0 0.0
    %1018 = vmatmul.mubr.f32.gmra.mrb[0].mxu0 %v880
    %v1019 = vpop.f32.mrb[0].mxu0
    %v1020 = vadd.f32 0.0, %v1019
    %v1021 = vpop.f32.mrb[0].mxu0
    %1022 = vdwg.mxu0
    %v1023 = vadd.f32 %v122, %v949
    %v1024 = vxor.u32 %v1023, 2147483648
    %v1025 = vmul.f32 %v1024, 1.442695
    %v1026 = vpow.pop %v1025
    %v1027 = vadd.f32 %v1026, 1.0
    %v1028 = vrcp.pop %v1027
    %v1029 = vmul.f32 1.0, %v1028
    %v1030 = vadd.f32 %v949, %v217
    %1032 = vrot.lane.b32.xlu0 %v1030, 64
    %v1033 = vpop.permute.xlu0 %1032
    %v1035 = vmul.f32 %v1029, %v1033
    %1037 = vrot.lane.b32.xlu0 %v1035, 64
    %v1038 = vpop.permute.xlu0 %1037
    %v1040 = vadd.f32 %v122, %v1038
    %v1041 = vtanh.pop %v1040
    %v1042 = vsub.f32 1.0, %v1029
    %1044 = vrot.lane.b32.xlu0 %v1041, 96
    %v1045 = vpop.permute.xlu0 %1044
    %v1047 = vmul.f32 %v1042, %v1045
    %v1048 = vmul.f32 %v1029, %v840
    %v1049 = vadd.f32 %v1047, %v1048
    %v1050 = vadd.f32 %v1020, %v54
    %v1051 = vadd.f32 %v1050, %v951
    %v1052 = vxor.u32 %v1051, 2147483648
    %v1053 = vmul.f32 %v1052, 1.442695
    %v1054 = vpow.pop %v1053
    %v1055 = vadd.f32 %v1054, 1.0
    %v1056 = vrcp.pop %v1055
    %v1057 = vmul.f32 1.0, %v1056
    %v1058 = vadd.f32 %v951, %v429
    %1060 = vrot.lane.b32.xlu0 %v1058, 64
    %v1061 = vpop.permute.xlu0 %1060
    %v1063 = vmul.f32 %v1057, %v1061
    %1065 = vrot.lane.b32.xlu0 %v1063, 64
    %v1066 = vpop.permute.xlu0 %1065
    %v1068 = vadd.f32 %v1050, %v1066
    %v1069 = vtanh.pop %v1068
    %v1070 = vsub.f32 1.0, %v1057
    %1072 = vrot.lane.b32.xlu0 %v1069, 96
    %v1073 = vpop.permute.xlu0 %1072
    %v1075 = vmul.f32 %v1070, %v1073
    %v1076 = vmul.f32 %v1057, %v868
    %v1077 = vadd.f32 %v1075, %v1076
    %1079 = vrot.lane.b32.xlu0 %v1077, 96
    %v1080 = vpop.permute.xlu0 %1079
    %1082 = vst.msk [vmem:[#allocation2 + $0x18] sm:$0xff] %vm132, %v1080
    %1084 = vrot.lane.b32.xlu0 %v1049, 96
    %v1085 = vpop.permute.xlu0 %1084
    %v1087 = vsel %vm132, %v1085, %v1077
    %v1089 = vsel %vm134, %v1087, 0
    %1091 = vmatprep.subr.mxu0 %v29
    %1092 = vmatpush1.msra.mxu0 %v28
    %1093 = vmatprep.subr.mxu0 %v32
    %1094 = vmatpush1.msra.mxu0 %v31
    %1095 = vmatprep.subr.mxu0 %v35
    %1096 = vmatpush1.msra.mxu0 %v34
    %1097 = vmatprep.subr.mxu0 %v38
    %1098 = vmatpush1.msra.mxu0 %v37
    %1099 = vmatprep.subr.mxu0 %v41
    %1100 = vmatpush1.msra.mxu0 %v40
    %1101 = vmatprep.subr.mxu0 %v44
    %1102 = vmatpush1.msra.mxu0 %v43
    %1103 = vmatprep.subr.mxu0 %v47
    %1104 = vmatpush1.msra.mxu0 %v46
    %1105 = vmatprep.subr.mxu0 %v50
    %1106 = vmatpush1.msra.mxu0 %v49
    %1107 = vmatprep.subr.mxu0 0.0
    %1108 = vmatpush1.msra.mxu0 0.0
    %1109 = vmatprep.subr.mxu0 0.0
    %1110 = vmatpush1.msra.mxu0 0.0
    %1111 = vmatprep.subr.mxu0 0.0
    %1112 = vmatpush1.msra.mxu0 0.0
    %1113 = vmatprep.subr.mxu0 0.0
    %1114 = vmatpush1.msra.mxu0 0.0
    %1115 = vmatprep.subr.mxu0 0.0
    %1116 = vmatpush1.msra.mxu0 0.0
    %1117 = vmatprep.subr.mxu0 0.0
    %1118 = vmatpush1.msra.mxu0 0.0
    %1119 = vmatprep.subr.mxu0 0.0
    %1120 = vmatpush1.msra.mxu0 0.0
    %1121 = vmatprep.subr.mxu0 0.0
    %1122 = vmatpush1.msra.mxu0 0.0
    %1123 = vmatprep.subr.mxu0 0.0
    %1124 = vmatpush1.msra.mxu0 0.0
    %1125 = vmatprep.subr.mxu0 0.0
    %1126 = vmatpush1.msra.mxu0 0.0
    %1127 = vmatprep.subr.mxu0 0.0
    %1128 = vmatpush1.msra.mxu0 0.0
    %1129 = vmatprep.subr.mxu0 0.0
    %1130 = vmatpush1.msra.mxu0 0.0
    %1131 = vmatprep.subr.mxu0 0.0
    %1132 = vmatpush1.msra.mxu0 0.0
    %1133 = vmatprep.subr.mxu0 0.0
    %1134 = vmatpush1.msra.mxu0 0.0
    %1135 = vmatprep.subr.mxu0 0.0
    %1136 = vmatpush1.msra.mxu0 0.0
    %1137 = vmatprep.subr.mxu0 0.0
    %1138 = vmatpush1.msra.mxu0 0.0
    %1139 = vmatprep.subr.mxu0 0.0
    %1140 = vmatpush1.msra.mxu0 0.0
    %1141 = vmatprep.subr.mxu0 0.0
    %1142 = vmatpush1.msra.mxu0 0.0
    %1143 = vmatprep.subr.mxu0 0.0
    %1144 = vmatpush1.msra.mxu0 0.0
    %1145 = vmatprep.subr.mxu0 0.0
    %1146 = vmatpush1.msra.mxu0 0.0
    %1147 = vmatprep.subr.mxu0 0.0
    %1148 = vmatpush1.msra.mxu0 0.0
    %1149 = vmatprep.subr.mxu0 0.0
    %1150 = vmatpush1.msra.mxu0 0.0
    %1151 = vmatprep.subr.mxu0 0.0
    %1152 = vmatpush1.msra.mxu0 0.0
    %1153 = vmatprep.subr.mxu0 0.0
    %1154 = vmatpush1.msra.mxu0 0.0
    %1155 = vmatprep.mubr.f32.mxu0 0.0
    %1156 = vmatmul.mubr.f32.gmra.mrb[0].mxu0 %v1089
    %v1157 = vpop.f32.mrb[0].mxu0
    %v1158 = vadd.f32 0.0, %v1157
    %v1159 = vpop.f32.mrb[0].mxu0
    %v1160 = vadd.f32 0.0, %v1159
    %1161 = vdwg.mxu0
    %1162 = vmatprep.subr.mxu0 0.0
    %1163 = vmatpush1.msra.mxu0 %v30
    %1164 = vmatprep.subr.mxu0 0.0
    %1165 = vmatpush1.msra.mxu0 %v33
    %1166 = vmatprep.subr.mxu0 0.0
    %1167 = vmatpush1.msra.mxu0 %v36
    %1168 = vmatprep.subr.mxu0 0.0
    %1169 = vmatpush1.msra.mxu0 %v39
    %1170 = vmatprep.subr.mxu0 0.0
    %1171 = vmatpush1.msra.mxu0 %v42
    %1172 = vmatprep.subr.mxu0 0.0
    %1173 = vmatpush1.msra.mxu0 %v45
    %1174 = vmatprep.subr.mxu0 0.0
    %1175 = vmatpush1.msra.mxu0 %v48
    %1176 = vmatprep.subr.mxu0 0.0
    %1177 = vmatpush1.msra.mxu0 %v51
    %1178 = vmatprep.subr.mxu0 0.0
    %1179 = vmatpush1.msra.mxu0 0.0
    %1180 = vmatprep.subr.mxu0 0.0
    %1181 = vmatpush1.msra.mxu0 0.0
    %1182 = vmatprep.subr.mxu0 0.0
    %1183 = vmatpush1.msra.mxu0 0.0
    %1184 = vmatprep.subr.mxu0 0.0
    %1185 = vmatpush1.msra.mxu0 0.0
    %1186 = vmatprep.subr.mxu0 0.0
    %1187 = vmatpush1.msra.mxu0 0.0
    %1188 = vmatprep.subr.mxu0 0.0
    %1189 = vmatpush1.msra.mxu0 0.0
    %1190 = vmatprep.subr.mxu0 0.0
    %1191 = vmatpush1.msra.mxu0 0.0
    %1192 = vmatprep.subr.mxu0 0.0
    %1193 = vmatpush1.msra.mxu0 0.0
    %1194 = vmatprep.subr.mxu0 0.0
    %1195 = vmatpush1.msra.mxu0 0.0
    %1196 = vmatprep.subr.mxu0 0.0
    %1197 = vmatpush1.msra.mxu0 0.0
    %1198 = vmatprep.subr.mxu0 0.0
    %1199 = vmatpush1.msra.mxu0 0.0
    %1200 = vmatprep.subr.mxu0 0.0
    %1201 = vmatpush1.msra.mxu0 0.0
    %1202 = vmatprep.subr.mxu0 0.0
    %1203 = vmatpush1.msra.mxu0 0.0
    %1204 = vmatprep.subr.mxu0 0.0
    %1205 = vmatpush1.msra.mxu0 0.0
    %1206 = vmatprep.subr.mxu0 0.0
    %1207 = vmatpush1.msra.mxu0 0.0
    %1208 = vmatprep.subr.mxu0 0.0
    %1209 = vmatpush1.msra.mxu0 0.0
    %1210 = vmatprep.subr.mxu0 0.0
    %1211 = vmatpush1.msra.mxu0 0.0
    %1212 = vmatprep.subr.mxu0 0.0
    %1213 = vmatpush1.msra.mxu0 0.0
    %1214 = vmatprep.subr.mxu0 0.0
    %1215 = vmatpush1.msra.mxu0 0.0
    %1216 = vmatprep.subr.mxu0 0.0
    %1217 = vmatpush1.msra.mxu0 0.0
    %1218 = vmatprep.subr.mxu0 0.0
    %1219 = vmatpush1.msra.mxu0 0.0
    %1220 = vmatprep.subr.mxu0 0.0
    %1221 = vmatpush1.msra.mxu0 0.0
    %1222 = vmatprep.subr.mxu0 0.0
    %1223 = vmatpush1.msra.mxu0 0.0
    %1224 = vmatprep.subr.mxu0 0.0
    %1225 = vmatpush1.msra.mxu0 0.0
    %1226 = vmatprep.mubr.f32.mxu0 0.0
    %1227 = vmatmul.mubr.f32.gmra.mrb[0].mxu0 %v1089
    %v1228 = vpop.f32.mrb[0].mxu0
    %v1229 = vadd.f32 0.0, %v1228
    %v1230 = vpop.f32.mrb[0].mxu0
    %1231 = vdwg.mxu0
    %v1232 = vadd.f32 %v123, %v1158
    %v1233 = vxor.u32 %v1232, 2147483648
    %v1234 = vmul.f32 %v1233, 1.442695
    %v1235 = vpow.pop %v1234
    %v1236 = vadd.f32 %v1235, 1.0
    %v1237 = vrcp.pop %v1236
    %v1238 = vmul.f32 1.0, %v1237
    %v1239 = vadd.f32 %v1158, %v217
    %1241 = vrot.lane.b32.xlu0 %v1239, 64
    %v1242 = vpop.permute.xlu0 %1241
    %v1244 = vmul.f32 %v1238, %v1242
    %1246 = vrot.lane.b32.xlu0 %v1244, 64
    %v1247 = vpop.permute.xlu0 %1246
    %v1249 = vadd.f32 %v123, %v1247
    %v1250 = vtanh.pop %v1249
    %v1251 = vsub.f32 1.0, %v1238
    %1253 = vrot.lane.b32.xlu0 %v1250, 96
    %v1254 = vpop.permute.xlu0 %1253
    %v1256 = vmul.f32 %v1251, %v1254
    %v1257 = vmul.f32 %v1238, %v1049
    %v1258 = vadd.f32 %v1256, %v1257
    %v1259 = vadd.f32 %v1229, %v54
    %v1260 = vadd.f32 %v1259, %v1160
    %v1261 = vxor.u32 %v1260, 2147483648
    %v1262 = vmul.f32 %v1261, 1.442695
    %v1263 = vpow.pop %v1262
    %v1264 = vadd.f32 %v1263, 1.0
    %v1265 = vrcp.pop %v1264
    %v1266 = vmul.f32 1.0, %v1265
    %v1267 = vadd.f32 %v1160, %v429
    %1269 = vrot.lane.b32.xlu0 %v1267, 64
    %v1270 = vpop.permute.xlu0 %1269
    %v1272 = vmul.f32 %v1266, %v1270
    %1274 = vrot.lane.b32.xlu0 %v1272, 64
    %v1275 = vpop.permute.xlu0 %1274
    %v1277 = vadd.f32 %v1259, %v1275
    %v1278 = vtanh.pop %v1277
    %v1279 = vsub.f32 1.0, %v1266
    %1281 = vrot.lane.b32.xlu0 %v1278, 96
    %v1282 = vpop.permute.xlu0 %1281
    %v1284 = vmul.f32 %v1279, %v1282
    %v1285 = vmul.f32 %v1266, %v1077
    %v1286 = vadd.f32 %v1284, %v1285
    %1288 = vrot.lane.b32.xlu0 %v1286, 96
    %v1289 = vpop.permute.xlu0 %1288
    %1291 = vst.msk [vmem:[#allocation2 + $0x20] sm:$0xff] %vm132, %v1289
    %1293 = vrot.lane.b32.xlu0 %v1258, 96
    %v1294 = vpop.permute.xlu0 %1293
    %v1296 = vsel %vm132, %v1294, %v1286
    %v1298 = vsel %vm134, %v1296, 0
    %1300 = vmatprep.subr.mxu0 %v29
    %1301 = vmatpush1.msra.mxu0 %v28
    %1302 = vmatprep.subr.mxu0 %v32
    %1303 = vmatpush1.msra.mxu0 %v31
    %1304 = vmatprep.subr.mxu0 %v35
    %1305 = vmatpush1.msra.mxu0 %v34
    %1306 = vmatprep.subr.mxu0 %v38
    %1307 = vmatpush1.msra.mxu0 %v37
    %1308 = vmatprep.subr.mxu0 %v41
    %1309 = vmatpush1.msra.mxu0 %v40
    %1310 = vmatprep.subr.mxu0 %v44
    %1311 = vmatpush1.msra.mxu0 %v43
    %1312 = vmatprep.subr.mxu0 %v47
    %1313 = vmatpush1.msra.mxu0 %v46
    %1314 = vmatprep.subr.mxu0 %v50
    %1315 = vmatpush1.msra.mxu0 %v49
    %1316 = vmatprep.subr.mxu0 0.0
    %1317 = vmatpush1.msra.mxu0 0.0
    %1318 = vmatprep.subr.mxu0 0.0
    %1319 = vmatpush1.msra.mxu0 0.0
    %1320 = vmatprep.subr.mxu0 0.0
    %1321 = vmatpush1.msra.mxu0 0.0
    %1322 = vmatprep.subr.mxu0 0.0
    %1323 = vmatpush1.msra.mxu0 0.0
    %1324 = vmatprep.subr.mxu0 0.0
    %1325 = vmatpush1.msra.mxu0 0.0
    %1326 = vmatprep.subr.mxu0 0.0
    %1327 = vmatpush1.msra.mxu0 0.0
    %1328 = vmatprep.subr.mxu0 0.0
    %1329 = vmatpush1.msra.mxu0 0.0
    %1330 = vmatprep.subr.mxu0 0.0
    %1331 = vmatpush1.msra.mxu0 0.0
    %1332 = vmatprep.subr.mxu0 0.0
    %1333 = vmatpush1.msra.mxu0 0.0
    %1334 = vmatprep.subr.mxu0 0.0
    %1335 = vmatpush1.msra.mxu0 0.0
    %1336 = vmatprep.subr.mxu0 0.0
    %1337 = vmatpush1.msra.mxu0 0.0
    %1338 = vmatprep.subr.mxu0 0.0
    %1339 = vmatpush1.msra.mxu0 0.0
    %1340 = vmatprep.subr.mxu0 0.0
    %1341 = vmatpush1.msra.mxu0 0.0
    %1342 = vmatprep.subr.mxu0 0.0
    %1343 = vmatpush1.msra.mxu0 0.0
    %1344 = vmatprep.subr.mxu0 0.0
    %1345 = vmatpush1.msra.mxu0 0.0
    %1346 = vmatprep.subr.mxu0 0.0
    %1347 = vmatpush1.msra.mxu0 0.0
    %1348 = vmatprep.subr.mxu0 0.0
    %1349 = vmatpush1.msra.mxu0 0.0
    %1350 = vmatprep.subr.mxu0 0.0
    %1351 = vmatpush1.msra.mxu0 0.0
    %1352 = vmatprep.subr.mxu0 0.0
    %1353 = vmatpush1.msra.mxu0 0.0
    %1354 = vmatprep.subr.mxu0 0.0
    %1355 = vmatpush1.msra.mxu0 0.0
    %1356 = vmatprep.subr.mxu0 0.0
    %1357 = vmatpush1.msra.mxu0 0.0
    %1358 = vmatprep.subr.mxu0 0.0
    %1359 = vmatpush1.msra.mxu0 0.0
    %1360 = vmatprep.subr.mxu0 0.0
    %1361 = vmatpush1.msra.mxu0 0.0
    %1362 = vmatprep.subr.mxu0 0.0
    %1363 = vmatpush1.msra.mxu0 0.0
    %1364 = vmatprep.mubr.f32.mxu0 0.0
    %1365 = vmatmul.mubr.f32.gmra.mrb[0].mxu0 %v1298
    %v1366 = vpop.f32.mrb[0].mxu0
    %v1367 = vadd.f32 0.0, %v1366
    %v1368 = vpop.f32.mrb[0].mxu0
    %v1369 = vadd.f32 0.0, %v1368
    %1370 = vdwg.mxu0
    %1371 = vmatprep.subr.mxu0 0.0
    %1372 = vmatpush1.msra.mxu0 %v30
    %1373 = vmatprep.subr.mxu0 0.0
    %1374 = vmatpush1.msra.mxu0 %v33
    %1375 = vmatprep.subr.mxu0 0.0
    %1376 = vmatpush1.msra.mxu0 %v36
    %1377 = vmatprep.subr.mxu0 0.0
    %1378 = vmatpush1.msra.mxu0 %v39
    %1379 = vmatprep.subr.mxu0 0.0
    %1380 = vmatpush1.msra.mxu0 %v42
    %1381 = vmatprep.subr.mxu0 0.0
    %1382 = vmatpush1.msra.mxu0 %v45
    %1383 = vmatprep.subr.mxu0 0.0
    %1384 = vmatpush1.msra.mxu0 %v48
    %1385 = vmatprep.subr.mxu0 0.0
    %1386 = vmatpush1.msra.mxu0 %v51
    %1387 = vmatprep.subr.mxu0 0.0
    %1388 = vmatpush1.msra.mxu0 0.0
    %1389 = vmatprep.subr.mxu0 0.0
    %1390 = vmatpush1.msra.mxu0 0.0
    %1391 = vmatprep.subr.mxu0 0.0
    %1392 = vmatpush1.msra.mxu0 0.0
    %1393 = vmatprep.subr.mxu0 0.0
    %1394 = vmatpush1.msra.mxu0 0.0
    %1395 = vmatprep.subr.mxu0 0.0
    %1396 = vmatpush1.msra.mxu0 0.0
    %1397 = vmatprep.subr.mxu0 0.0
    %1398 = vmatpush1.msra.mxu0 0.0
    %1399 = vmatprep.subr.mxu0 0.0
    %1400 = vmatpush1.msra.mxu0 0.0
    %1401 = vmatprep.subr.mxu0 0.0
    %1402 = vmatpush1.msra.mxu0 0.0
    %1403 = vmatprep.subr.mxu0 0.0
    %1404 = vmatpush1.msra.mxu0 0.0
    %1405 = vmatprep.subr.mxu0 0.0
    %1406 = vmatpush1.msra.mxu0 0.0
    %1407 = vmatprep.subr.mxu0 0.0
    %1408 = vmatpush1.msra.mxu0 0.0
    %1409 = vmatprep.subr.mxu0 0.0
    %1410 = vmatpush1.msra.mxu0 0.0
    %1411 = vmatprep.subr.mxu0 0.0
    %1412 = vmatpush1.msra.mxu0 0.0
    %1413 = vmatprep.subr.mxu0 0.0
    %1414 = vmatpush1.msra.mxu0 0.0
    %1415 = vmatprep.subr.mxu0 0.0
    %1416 = vmatpush1.msra.mxu0 0.0
    %1417 = vmatprep.subr.mxu0 0.0
    %1418 = vmatpush1.msra.mxu0 0.0
    %1419 = vmatprep.subr.mxu0 0.0
    %1420 = vmatpush1.msra.mxu0 0.0
    %1421 = vmatprep.subr.mxu0 0.0
    %1422 = vmatpush1.msra.mxu0 0.0
    %1423 = vmatprep.subr.mxu0 0.0
    %1424 = vmatpush1.msra.mxu0 0.0
    %1425 = vmatprep.subr.mxu0 0.0
    %1426 = vmatpush1.msra.mxu0 0.0
    %1427 = vmatprep.subr.mxu0 0.0
    %1428 = vmatpush1.msra.mxu0 0.0
    %1429 = vmatprep.subr.mxu0 0.0
    %1430 = vmatpush1.msra.mxu0 0.0
    %1431 = vmatprep.subr.mxu0 0.0
    %1432 = vmatpush1.msra.mxu0 0.0
    %1433 = vmatprep.subr.mxu0 0.0
    %1434 = vmatpush1.msra.mxu0 0.0
    %1435 = vmatprep.mubr.f32.mxu0 0.0
    %1436 = vmatmul.mubr.f32.gmra.mrb[0].mxu0 %v1298
    %v1437 = vpop.f32.mrb[0].mxu0
    %v1438 = vadd.f32 0.0, %v1437
    %v1439 = vpop.f32.mrb[0].mxu0
    %1440 = vdwg.mxu0
    %v1441 = vadd.f32 %v124, %v1367
    %v1442 = vxor.u32 %v1441, 2147483648
    %v1443 = vmul.f32 %v1442, 1.442695
    %v1444 = vpow.pop %v1443
    %v1445 = vadd.f32 %v1444, 1.0
    %v1446 = vrcp.pop %v1445
    %v1447 = vmul.f32 1.0, %v1446
    %v1448 = vadd.f32 %v1367, %v217
    %1450 = vrot.lane.b32.xlu0 %v1448, 64
    %v1451 = vpop.permute.xlu0 %1450
    %v1453 = vmul.f32 %v1447, %v1451
    %1455 = vrot.lane.b32.xlu0 %v1453, 64
    %v1456 = vpop.permute.xlu0 %1455
    %v1458 = vadd.f32 %v124, %v1456
    %v1459 = vtanh.pop %v1458
    %v1460 = vsub.f32 1.0, %v1447
    %1462 = vrot.lane.b32.xlu0 %v1459, 96
    %v1463 = vpop.permute.xlu0 %1462
    %v1465 = vmul.f32 %v1460, %v1463
    %v1466 = vmul.f32 %v1447, %v1258
    %v1467 = vadd.f32 %v1465, %v1466
    %v1468 = vadd.f32 %v1438, %v54
    %v1469 = vadd.f32 %v1468, %v1369
    %v1470 = vxor.u32 %v1469, 2147483648
    %v1471 = vmul.f32 %v1470, 1.442695
    %v1472 = vpow.pop %v1471
    %v1473 = vadd.f32 %v1472, 1.0
    %v1474 = vrcp.pop %v1473
    %v1475 = vmul.f32 1.0, %v1474
    %v1476 = vadd.f32 %v1369, %v429
    %1478 = vrot.lane.b32.xlu0 %v1476, 64
    %v1479 = vpop.permute.xlu0 %1478
    %v1481 = vmul.f32 %v1475, %v1479
    %1483 = vrot.lane.b32.xlu0 %v1481, 64
    %v1484 = vpop.permute.xlu0 %1483
    %v1486 = vadd.f32 %v1468, %v1484
    %v1487 = vtanh.pop %v1486
    %v1488 = vsub.f32 1.0, %v1475
    %1490 = vrot.lane.b32.xlu0 %v1487, 96
    %v1491 = vpop.permute.xlu0 %1490
    %v1493 = vmul.f32 %v1488, %v1491
    %v1494 = vmul.f32 %v1475, %v1286
    %v1495 = vadd.f32 %v1493, %v1494
    %1497 = vrot.lane.b32.xlu0 %v1495, 96
    %v1498 = vpop.permute.xlu0 %1497
    %1500 = vst.msk [vmem:[#allocation2 + $0x28] sm:$0xff] %vm132, %v1498
    %1502 = vrot.lane.b32.xlu0 %v1467, 96
    %v1503 = vpop.permute.xlu0 %1502
    %v1505 = vsel %vm132, %v1503, %v1495
    %v1507 = vsel %vm134, %v1505, 0
    %1509 = vmatprep.subr.mxu0 %v29
    %1510 = vmatpush1.msra.mxu0 %v28
    %1511 = vmatprep.subr.mxu0 %v32
    %1512 = vmatpush1.msra.mxu0 %v31
    %1513 = vmatprep.subr.mxu0 %v35
    %1514 = vmatpush1.msra.mxu0 %v34
    %1515 = vmatprep.subr.mxu0 %v38
    %1516 = vmatpush1.msra.mxu0 %v37
    %1517 = vmatprep.subr.mxu0 %v41
    %1518 = vmatpush1.msra.mxu0 %v40
    %1519 = vmatprep.subr.mxu0 %v44
    %1520 = vmatpush1.msra.mxu0 %v43
    %1521 = vmatprep.subr.mxu0 %v47
    %1522 = vmatpush1.msra.mxu0 %v46
    %1523 = vmatprep.subr.mxu0 %v50
    %1524 = vmatpush1.msra.mxu0 %v49
    %1525 = vmatprep.subr.mxu0 0.0
    %1526 = vmatpush1.msra.mxu0 0.0
    %1527 = vmatprep.subr.mxu0 0.0
    %1528 = vmatpush1.msra.mxu0 0.0
    %1529 = vmatprep.subr.mxu0 0.0
    %1530 = vmatpush1.msra.mxu0 0.0
    %1531 = vmatprep.subr.mxu0 0.0
    %1532 = vmatpush1.msra.mxu0 0.0
    %1533 = vmatprep.subr.mxu0 0.0
    %1534 = vmatpush1.msra.mxu0 0.0
    %1535 = vmatprep.subr.mxu0 0.0
    %1536 = vmatpush1.msra.mxu0 0.0
    %1537 = vmatprep.subr.mxu0 0.0
    %1538 = vmatpush1.msra.mxu0 0.0
    %1539 = vmatprep.subr.mxu0 0.0
    %1540 = vmatpush1.msra.mxu0 0.0
    %1541 = vmatprep.subr.mxu0 0.0
    %1542 = vmatpush1.msra.mxu0 0.0
    %1543 = vmatprep.subr.mxu0 0.0
    %1544 = vmatpush1.msra.mxu0 0.0
    %1545 = vmatprep.subr.mxu0 0.0
    %1546 = vmatpush1.msra.mxu0 0.0
    %1547 = vmatprep.subr.mxu0 0.0
    %1548 = vmatpush1.msra.mxu0 0.0
    %1549 = vmatprep.subr.mxu0 0.0
    %1550 = vmatpush1.msra.mxu0 0.0
    %1551 = vmatprep.subr.mxu0 0.0
    %1552 = vmatpush1.msra.mxu0 0.0
    %1553 = vmatprep.subr.mxu0 0.0
    %1554 = vmatpush1.msra.mxu0 0.0
    %1555 = vmatprep.subr.mxu0 0.0
    %1556 = vmatpush1.msra.mxu0 0.0
    %1557 = vmatprep.subr.mxu0 0.0
    %1558 = vmatpush1.msra.mxu0 0.0
    %1559 = vmatprep.subr.mxu0 0.0
    %1560 = vmatpush1.msra.mxu0 0.0
    %1561 = vmatprep.subr.mxu0 0.0
    %1562 = vmatpush1.msra.mxu0 0.0
    %1563 = vmatprep.subr.mxu0 0.0
    %1564 = vmatpush1.msra.mxu0 0.0
    %1565 = vmatprep.subr.mxu0 0.0
    %1566 = vmatpush1.msra.mxu0 0.0
    %1567 = vmatprep.subr.mxu0 0.0
    %1568 = vmatpush1.msra.mxu0 0.0
    %1569 = vmatprep.subr.mxu0 0.0
    %1570 = vmatpush1.msra.mxu0 0.0
    %1571 = vmatprep.subr.mxu0 0.0
    %1572 = vmatpush1.msra.mxu0 0.0
    %1573 = vmatprep.mubr.f32.mxu0 0.0
    %1574 = vmatmul.mubr.f32.gmra.mrb[0].mxu0 %v1507
    %v1575 = vpop.f32.mrb[0].mxu0
    %v1576 = vadd.f32 0.0, %v1575
    %v1577 = vpop.f32.mrb[0].mxu0
    %v1578 = vadd.f32 0.0, %v1577
    %1579 = vdwg.mxu0
    %1580 = vmatprep.subr.mxu0 0.0
    %1581 = vmatpush1.msra.mxu0 %v30
    %1582 = vmatprep.subr.mxu0 0.0
    %1583 = vmatpush1.msra.mxu0 %v33
    %1584 = vmatprep.subr.mxu0 0.0
    %1585 = vmatpush1.msra.mxu0 %v36
    %1586 = vmatprep.subr.mxu0 0.0
    %1587 = vmatpush1.msra.mxu0 %v39
    %1588 = vmatprep.subr.mxu0 0.0
    %1589 = vmatpush1.msra.mxu0 %v42
    %1590 = vmatprep.subr.mxu0 0.0
    %1591 = vmatpush1.msra.mxu0 %v45
    %1592 = vmatprep.subr.mxu0 0.0
    %1593 = vmatpush1.msra.mxu0 %v48
    %1594 = vmatprep.subr.mxu0 0.0
    %1595 = vmatpush1.msra.mxu0 %v51
    %1596 = vmatprep.subr.mxu0 0.0
    %1597 = vmatpush1.msra.mxu0 0.0
    %1598 = vmatprep.subr.mxu0 0.0
    %1599 = vmatpush1.msra.mxu0 0.0
    %1600 = vmatprep.subr.mxu0 0.0
    %1601 = vmatpush1.msra.mxu0 0.0
    %1602 = vmatprep.subr.mxu0 0.0
    %1603 = vmatpush1.msra.mxu0 0.0
    %1604 = vmatprep.subr.mxu0 0.0
    %1605 = vmatpush1.msra.mxu0 0.0
    %1606 = vmatprep.subr.mxu0 0.0
    %1607 = vmatpush1.msra.mxu0 0.0
    %1608 = vmatprep.subr.mxu0 0.0
    %1609 = vmatpush1.msra.mxu0 0.0
    %1610 = vmatprep.subr.mxu0 0.0
    %1611 = vmatpush1.msra.mxu0 0.0
    %1612 = vmatprep.subr.mxu0 0.0
    %1613 = vmatpush1.msra.mxu0 0.0
    %1614 = vmatprep.subr.mxu0 0.0
    %1615 = vmatpush1.msra.mxu0 0.0
    %1616 = vmatprep.subr.mxu0 0.0
    %1617 = vmatpush1.msra.mxu0 0.0
    %1618 = vmatprep.subr.mxu0 0.0
    %1619 = vmatpush1.msra.mxu0 0.0
    %1620 = vmatprep.subr.mxu0 0.0
    %1621 = vmatpush1.msra.mxu0 0.0
    %1622 = vmatprep.subr.mxu0 0.0
    %1623 = vmatpush1.msra.mxu0 0.0
    %1624 = vmatprep.subr.mxu0 0.0
    %1625 = vmatpush1.msra.mxu0 0.0
    %1626 = vmatprep.subr.mxu0 0.0
    %1627 = vmatpush1.msra.mxu0 0.0
    %1628 = vmatprep.subr.mxu0 0.0
    %1629 = vmatpush1.msra.mxu0 0.0
    %1630 = vmatprep.subr.mxu0 0.0
    %1631 = vmatpush1.msra.mxu0 0.0
    %1632 = vmatprep.subr.mxu0 0.0
    %1633 = vmatpush1.msra.mxu0 0.0
    %1634 = vmatprep.subr.mxu0 0.0
    %1635 = vmatpush1.msra.mxu0 0.0
    %1636 = vmatprep.subr.mxu0 0.0
    %1637 = vmatpush1.msra.mxu0 0.0
    %1638 = vmatprep.subr.mxu0 0.0
    %1639 = vmatpush1.msra.mxu0 0.0
    %1640 = vmatprep.subr.mxu0 0.0
    %1641 = vmatpush1.msra.mxu0 0.0
    %1642 = vmatprep.subr.mxu0 0.0
    %1643 = vmatpush1.msra.mxu0 0.0
    %1644 = vmatprep.mubr.f32.mxu0 0.0
    %1645 = vmatmul.mubr.f32.gmra.mrb[0].mxu0 %v1507
    %v1646 = vpop.f32.mrb[0].mxu0
    %v1647 = vadd.f32 0.0, %v1646
    %v1648 = vpop.f32.mrb[0].mxu0
    %1649 = vdwg.mxu0
    %v1650 = vadd.f32 %v125, %v1576
    %v1651 = vxor.u32 %v1650, 2147483648
    %v1652 = vmul.f32 %v1651, 1.442695
    %v1653 = vpow.pop %v1652
    %v1654 = vadd.f32 %v1653, 1.0
    %v1655 = vrcp.pop %v1654
    %v1656 = vmul.f32 1.0, %v1655
    %v1657 = vadd.f32 %v1576, %v217
    %1659 = vrot.lane.b32.xlu0 %v1657, 64
    %v1660 = vpop.permute.xlu0 %1659
    %v1662 = vmul.f32 %v1656, %v1660
    %1664 = vrot.lane.b32.xlu0 %v1662, 64
    %v1665 = vpop.permute.xlu0 %1664
    %v1667 = vadd.f32 %v125, %v1665
    %v1668 = vtanh.pop %v1667
    %v1669 = vsub.f32 1.0, %v1656
    %1671 = vrot.lane.b32.xlu0 %v1668, 96
    %v1672 = vpop.permute.xlu0 %1671
    %v1674 = vmul.f32 %v1669, %v1672
    %v1675 = vmul.f32 %v1656, %v1467
    %v1676 = vadd.f32 %v1674, %v1675
    %v1677 = vadd.f32 %v1647, %v54
    %v1678 = vadd.f32 %v1677, %v1578
    %v1679 = vxor.u32 %v1678, 2147483648
    %v1680 = vmul.f32 %v1679, 1.442695
    %v1681 = vpow.pop %v1680
    %v1682 = vadd.f32 %v1681, 1.0
    %v1683 = vrcp.pop %v1682
    %v1684 = vmul.f32 1.0, %v1683
    %v1685 = vadd.f32 %v1578, %v429
    %1687 = vrot.lane.b32.xlu0 %v1685, 64
    %v1688 = vpop.permute.xlu0 %1687
    %v1690 = vmul.f32 %v1684, %v1688
    %1692 = vrot.lane.b32.xlu0 %v1690, 64
    %v1693 = vpop.permute.xlu0 %1692
    %v1695 = vadd.f32 %v1677, %v1693
    %v1696 = vtanh.pop %v1695
    %v1697 = vsub.f32 1.0, %v1684
    %1699 = vrot.lane.b32.xlu0 %v1696, 96
    %v1700 = vpop.permute.xlu0 %1699
    %v1702 = vmul.f32 %v1697, %v1700
    %v1703 = vmul.f32 %v1684, %v1495
    %v1704 = vadd.f32 %v1702, %v1703
    %1706 = vrot.lane.b32.xlu0 %v1704, 96
    %v1707 = vpop.permute.xlu0 %1706
    %1709 = vst.msk [vmem:[#allocation2 + $0x30] sm:$0xff] %vm132, %v1707
    %1711 = vrot.lane.b32.xlu0 %v1676, 96
    %v1712 = vpop.permute.xlu0 %1711
    %v1714 = vsel %vm132, %v1712, %v1704
    %v1716 = vsel %vm134, %v1714, 0
    %1718 = vmatprep.subr.mxu0 %v29
    %1719 = vmatpush1.msra.mxu0 %v28
    %1720 = vmatprep.subr.mxu0 %v32
    %1721 = vmatpush1.msra.mxu0 %v31
    %1722 = vmatprep.subr.mxu0 %v35
    %1723 = vmatpush1.msra.mxu0 %v34
    %1724 = vmatprep.subr.mxu0 %v38
    %1725 = vmatpush1.msra.mxu0 %v37
    %1726 = vmatprep.subr.mxu0 %v41
    %1727 = vmatpush1.msra.mxu0 %v40
    %1728 = vmatprep.subr.mxu0 %v44
    %1729 = vmatpush1.msra.mxu0 %v43
    %1730 = vmatprep.subr.mxu0 %v47
    %1731 = vmatpush1.msra.mxu0 %v46
    %1732 = vmatprep.subr.mxu0 %v50
    %1733 = vmatpush1.msra.mxu0 %v49
    %1734 = vmatprep.subr.mxu0 0.0
    %1735 = vmatpush1.msra.mxu0 0.0
    %1736 = vmatprep.subr.mxu0 0.0
    %1737 = vmatpush1.msra.mxu0 0.0
    %1738 = vmatprep.subr.mxu0 0.0
    %1739 = vmatpush1.msra.mxu0 0.0
    %1740 = vmatprep.subr.mxu0 0.0
    %1741 = vmatpush1.msra.mxu0 0.0
    %1742 = vmatprep.subr.mxu0 0.0
    %1743 = vmatpush1.msra.mxu0 0.0
    %1744 = vmatprep.subr.mxu0 0.0
    %1745 = vmatpush1.msra.mxu0 0.0
    %1746 = vmatprep.subr.mxu0 0.0
    %1747 = vmatpush1.msra.mxu0 0.0
    %1748 = vmatprep.subr.mxu0 0.0
    %1749 = vmatpush1.msra.mxu0 0.0
    %1750 = vmatprep.subr.mxu0 0.0
    %1751 = vmatpush1.msra.mxu0 0.0
    %1752 = vmatprep.subr.mxu0 0.0
    %1753 = vmatpush1.msra.mxu0 0.0
    %1754 = vmatprep.subr.mxu0 0.0
    %1755 = vmatpush1.msra.mxu0 0.0
    %1756 = vmatprep.subr.mxu0 0.0
    %1757 = vmatpush1.msra.mxu0 0.0
    %1758 = vmatprep.subr.mxu0 0.0
    %1759 = vmatpush1.msra.mxu0 0.0
    %1760 = vmatprep.subr.mxu0 0.0
    %1761 = vmatpush1.msra.mxu0 0.0
    %1762 = vmatprep.subr.mxu0 0.0
    %1763 = vmatpush1.msra.mxu0 0.0
    %1764 = vmatprep.subr.mxu0 0.0
    %1765 = vmatpush1.msra.mxu0 0.0
    %1766 = vmatprep.subr.mxu0 0.0
    %1767 = vmatpush1.msra.mxu0 0.0
    %1768 = vmatprep.subr.mxu0 0.0
    %1769 = vmatpush1.msra.mxu0 0.0
    %1770 = vmatprep.subr.mxu0 0.0
    %1771 = vmatpush1.msra.mxu0 0.0
    %1772 = vmatprep.subr.mxu0 0.0
    %1773 = vmatpush1.msra.mxu0 0.0
    %1774 = vmatprep.subr.mxu0 0.0
    %1775 = vmatpush1.msra.mxu0 0.0
    %1776 = vmatprep.subr.mxu0 0.0
    %1777 = vmatpush1.msra.mxu0 0.0
    %1778 = vmatprep.subr.mxu0 0.0
    %1779 = vmatpush1.msra.mxu0 0.0
    %1780 = vmatprep.subr.mxu0 0.0
    %1781 = vmatpush1.msra.mxu0 0.0
    %1782 = vmatprep.mubr.f32.mxu0 0.0
    %1783 = vmatmul.mubr.f32.gmra.mrb[0].mxu0 %v1716
    %v1784 = vpop.f32.mrb[0].mxu0
    %v1785 = vpop.f32.mrb[0].mxu0
    %v1786 = vadd.f32 0.0, %v1785
    %1787 = vdwg.mxu0
    %1788 = vmatprep.subr.mxu0 0.0
    %1789 = vmatpush1.msra.mxu0 %v30
    %1790 = vmatprep.subr.mxu0 0.0
    %1791 = vmatpush1.msra.mxu0 %v33
    %1792 = vmatprep.subr.mxu0 0.0
    %1793 = vmatpush1.msra.mxu0 %v36
    %1794 = vmatprep.subr.mxu0 0.0
    %1795 = vmatpush1.msra.mxu0 %v39
    %1796 = vmatprep.subr.mxu0 0.0
    %1797 = vmatpush1.msra.mxu0 %v42
    %1798 = vmatprep.subr.mxu0 0.0
    %1799 = vmatpush1.msra.mxu0 %v45
    %1800 = vmatprep.subr.mxu0 0.0
    %1801 = vmatpush1.msra.mxu0 %v48
    %1802 = vmatprep.subr.mxu0 0.0
    %1803 = vmatpush1.msra.mxu0 %v51
    %1804 = vmatprep.subr.mxu0 0.0
    %1805 = vmatpush1.msra.mxu0 0.0
    %1806 = vmatprep.subr.mxu0 0.0
    %1807 = vmatpush1.msra.mxu0 0.0
    %1808 = vmatprep.subr.mxu0 0.0
    %1809 = vmatpush1.msra.mxu0 0.0
    %1810 = vmatprep.subr.mxu0 0.0
    %1811 = vmatpush1.msra.mxu0 0.0
    %1812 = vmatprep.subr.mxu0 0.0
    %1813 = vmatpush1.msra.mxu0 0.0
    %1814 = vmatprep.subr.mxu0 0.0
    %1815 = vmatpush1.msra.mxu0 0.0
    %1816 = vmatprep.subr.mxu0 0.0
    %1817 = vmatpush1.msra.mxu0 0.0
    %1818 = vmatprep.subr.mxu0 0.0
    %1819 = vmatpush1.msra.mxu0 0.0
    %1820 = vmatprep.subr.mxu0 0.0
    %1821 = vmatpush1.msra.mxu0 0.0
    %1822 = vmatprep.subr.mxu0 0.0
    %1823 = vmatpush1.msra.mxu0 0.0
    %1824 = vmatprep.subr.mxu0 0.0
    %1825 = vmatpush1.msra.mxu0 0.0
    %1826 = vmatprep.subr.mxu0 0.0
    %1827 = vmatpush1.msra.mxu0 0.0
    %1828 = vmatprep.subr.mxu0 0.0
    %1829 = vmatpush1.msra.mxu0 0.0
    %1830 = vmatprep.subr.mxu0 0.0
    %1831 = vmatpush1.msra.mxu0 0.0
    %1832 = vmatprep.subr.mxu0 0.0
    %1833 = vmatpush1.msra.mxu0 0.0
    %1834 = vmatprep.subr.mxu0 0.0
    %1835 = vmatpush1.msra.mxu0 0.0
    %1836 = vmatprep.subr.mxu0 0.0
    %1837 = vmatpush1.msra.mxu0 0.0
    %1838 = vmatprep.subr.mxu0 0.0
    %1839 = vmatpush1.msra.mxu0 0.0
    %1840 = vmatprep.subr.mxu0 0.0
    %1841 = vmatpush1.msra.mxu0 0.0
    %1842 = vmatprep.subr.mxu0 0.0
    %1843 = vmatpush1.msra.mxu0 0.0
    %1844 = vmatprep.subr.mxu0 0.0
    %1845 = vmatpush1.msra.mxu0 0.0
    %1846 = vmatprep.subr.mxu0 0.0
    %1847 = vmatpush1.msra.mxu0 0.0
    %1848 = vmatprep.subr.mxu0 0.0
    %1849 = vmatpush1.msra.mxu0 0.0
    %1850 = vmatprep.subr.mxu0 0.0
    %1851 = vmatpush1.msra.mxu0 0.0
    %1852 = vmatprep.mubr.f32.mxu0 0.0
    %1853 = vmatmul.mubr.f32.gmra.mrb[0].mxu0 %v1716
    %v1854 = vpop.f32.mrb[0].mxu0
    %v1855 = vadd.f32 0.0, %v1854
    %v1856 = vpop.f32.mrb[0].mxu0
    %1857 = vdwg.mxu0
    %v1858 = vadd.f32 %v1855, %v54
    %v1859 = vadd.f32 %v1858, %v1786
    %v1860 = vxor.u32 %v1859, 2147483648
    %v1861 = vmul.f32 %v1860, 1.442695
    %v1862 = vpow.pop %v1861
    %v1863 = vadd.f32 %v1862, 1.0
    %v1864 = vrcp.pop %v1863
    %v1865 = vmul.f32 1.0, %v1864
    %v1866 = vadd.f32 %v1786, %v429
    %1868 = vrot.lane.b32.xlu0 %v1866, 64
    %v1869 = vpop.permute.xlu0 %1868
    %v1871 = vmul.f32 %v1865, %v1869
    %1873 = vrot.lane.b32.xlu0 %v1871, 64
    %v1874 = vpop.permute.xlu0 %1873
    %v1876 = vadd.f32 %v1858, %v1874
    %v1877 = vtanh.pop %v1876
    %v1878 = vsub.f32 1.0, %v1865
    %1880 = vrot.lane.b32.xlu0 %v1877, 96
    %v1881 = vpop.permute.xlu0 %1880
    %v1883 = vmul.f32 %v1878, %v1881
    %v1884 = vmul.f32 %v1865, %v1704
    %v1885 = vadd.f32 %v1883, %v1884
    %1887 = vrot.lane.b32.xlu0 %v1885, 96
    %v1888 = vpop.permute.xlu0 %1887
    %1890 = vst.msk [vmem:[#allocation2 + $0x38] sm:$0xff] %vm132, %v1888
    %v1891 = vld [vmem:[#allocation2] sm:$0xff]
    %v1892 = vld [vmem:[#allocation2 + $0x8] sm:$0xff]
    %v1893 = vld [vmem:[#allocation2 + $0x10] sm:$0xff]
    %v1894 = vld [vmem:[#allocation2 + $0x18] sm:$0xff]
    %v1895 = vld [vmem:[#allocation2 + $0x20] sm:$0xff]
    %v1896 = vld [vmem:[#allocation2 + $0x28] sm:$0xff]
    %v1897 = vld [vmem:[#allocation2 + $0x30] sm:$0xff]
    %v1898 = vld [vmem:[#allocation2 + $0x38] sm:$0xff]
    %v1900 = vsel %vm132, %v1891, 0
    %v1903 = vsel %vm132, %v1892, 0
    %v1906 = vsel %vm132, %v1893, 0
    %v1909 = vsel %vm132, %v1894, 0
    %v1912 = vsel %vm132, %v1895, 0
    %v1915 = vsel %vm132, %v1896, 0
    %v1918 = vsel %vm132, %v1897, 0
    %v1921 = vsel %vm132, %v1898, 0
    %1923 = vmatprep.subr.mxu0 0.0
    %1924 = vmatpush1.msra.mxu0 %v57
    %1925 = vmatprep.subr.mxu0 0.0
    %1926 = vmatpush1.msra.mxu0 %v58
    %1927 = vmatprep.subr.mxu0 0.0
    %1928 = vmatpush1.msra.mxu0 %v59
    %1929 = vmatprep.subr.mxu0 0.0
    %1930 = vmatpush1.msra.mxu0 %v60
    %1931 = vmatprep.subr.mxu0 0.0
    %1932 = vmatpush1.msra.mxu0 0.0
    %1933 = vmatprep.subr.mxu0 0.0
    %1934 = vmatpush1.msra.mxu0 0.0
    %1935 = vmatprep.subr.mxu0 0.0
    %1936 = vmatpush1.msra.mxu0 0.0
    %1937 = vmatprep.subr.mxu0 0.0
    %1938 = vmatpush1.msra.mxu0 0.0
    %1939 = vmatprep.subr.mxu0 0.0
    %1940 = vmatpush1.msra.mxu0 0.0
    %1941 = vmatprep.subr.mxu0 0.0
    %1942 = vmatpush1.msra.mxu0 0.0
    %1943 = vmatprep.subr.mxu0 0.0
    %1944 = vmatpush1.msra.mxu0 0.0
    %1945 = vmatprep.subr.mxu0 0.0
    %1946 = vmatpush1.msra.mxu0 0.0
    %1947 = vmatprep.subr.mxu0 0.0
    %1948 = vmatpush1.msra.mxu0 0.0
    %1949 = vmatprep.subr.mxu0 0.0
    %1950 = vmatpush1.msra.mxu0 0.0
    %1951 = vmatprep.subr.mxu0 0.0
    %1952 = vmatpush1.msra.mxu0 0.0
    %1953 = vmatprep.subr.mxu0 0.0
    %1954 = vmatpush1.msra.mxu0 0.0
    %1955 = vmatprep.subr.mxu0 0.0
    %1956 = vmatpush1.msra.mxu0 0.0
    %1957 = vmatprep.subr.mxu0 0.0
    %1958 = vmatpush1.msra.mxu0 0.0
    %1959 = vmatprep.subr.mxu0 0.0
    %1960 = vmatpush1.msra.mxu0 0.0
    %1961 = vmatprep.subr.mxu0 0.0
    %1962 = vmatpush1.msra.mxu0 0.0
    %1963 = vmatprep.subr.mxu0 0.0
    %1964 = vmatpush1.msra.mxu0 0.0
    %1965 = vmatprep.subr.mxu0 0.0
    %1966 = vmatpush1.msra.mxu0 0.0
    %1967 = vmatprep.subr.mxu0 0.0
    %1968 = vmatpush1.msra.mxu0 0.0
    %1969 = vmatprep.subr.mxu0 0.0
    %1970 = vmatpush1.msra.mxu0 0.0
    %1971 = vmatprep.subr.mxu0 0.0
    %1972 = vmatpush1.msra.mxu0 0.0
    %1973 = vmatprep.subr.mxu0 0.0
    %1974 = vmatpush1.msra.mxu0 0.0
    %1975 = vmatprep.subr.mxu0 0.0
    %1976 = vmatpush1.msra.mxu0 0.0
    %1977 = vmatprep.subr.mxu0 0.0
    %1978 = vmatpush1.msra.mxu0 0.0
    %1979 = vmatprep.subr.mxu0 0.0
    %1980 = vmatpush1.msra.mxu0 0.0
    %1981 = vmatprep.subr.mxu0 0.0
    %1982 = vmatpush1.msra.mxu0 0.0
    %1983 = vmatprep.subr.mxu0 0.0
    %1984 = vmatpush1.msra.mxu0 0.0
    %1985 = vmatprep.subr.mxu0 0.0
    %1986 = vmatpush1.msra.mxu0 0.0
    %1987 = vmatprep.mubr.f32.mxu0 0.0
    %1988 = vmatmul.mubr.f32.gmra.mrb[0].mxu0 %v1900
    %v1989 = vpop.f32.mrb[0].mxu0
    %v1990 = vadd.f32 %v61, %v1989
    %v1991 = vpop.f32.mrb[0].mxu0
    %1992 = vmatprep.mubr.f32.mxu0 0.0
    %1993 = vmatmul.mubr.f32.gmra.mrb[0].mxu0 %v1903
    %v1994 = vpop.f32.mrb[0].mxu0
    %v1995 = vadd.f32 %v61, %v1994
    %v1996 = vpop.f32.mrb[0].mxu0
    %1997 = vmatprep.mubr.f32.mxu0 0.0
    %1998 = vmatmul.mubr.f32.gmra.mrb[0].mxu0 %v1906
    %v1999 = vpop.f32.mrb[0].mxu0
    %v2000 = vadd.f32 %v61, %v1999
    %v2001 = vpop.f32.mrb[0].mxu0
    %2002 = vmatprep.mubr.f32.mxu0 0.0
    %2003 = vmatmul.mubr.f32.gmra.mrb[0].mxu0 %v1909
    %v2004 = vpop.f32.mrb[0].mxu0
    %v2005 = vadd.f32 %v61, %v2004
    %v2006 = vpop.f32.mrb[0].mxu0
    %2007 = vmatprep.mubr.f32.mxu0 0.0
    %2008 = vmatmul.mubr.f32.gmra.mrb[0].mxu0 %v1912
    %v2009 = vpop.f32.mrb[0].mxu0
    %v2010 = vadd.f32 %v61, %v2009
    %v2011 = vpop.f32.mrb[0].mxu0
    %2012 = vmatprep.mubr.f32.mxu0 0.0
    %2013 = vmatmul.mubr.f32.gmra.mrb[0].mxu0 %v1915
    %v2014 = vpop.f32.mrb[0].mxu0
    %v2015 = vadd.f32 %v61, %v2014
    %v2016 = vpop.f32.mrb[0].mxu0
    %2017 = vmatprep.mubr.f32.mxu0 0.0
    %2018 = vmatmul.mubr.f32.gmra.mrb[0].mxu0 %v1918
    %v2019 = vpop.f32.mrb[0].mxu0
    %v2020 = vadd.f32 %v61, %v2019
    %v2021 = vpop.f32.mrb[0].mxu0
    %2022 = vmatprep.mubr.f32.mxu0 0.0
    %2023 = vmatmul.mubr.f32.gmra.mrb[0].mxu0 %v1921
    %v2024 = vpop.f32.mrb[0].mxu0
    %v2025 = vadd.f32 %v61, %v2024
    %v2026 = vpop.f32.mrb[0].mxu0
    %2027 = vdwg.mxu0
    %vm2028 = vcmask 7168
    %2029 = vst.msk [vmem:[%s3] sm:$0xff] %vm2028, %v1990
    %2030 = vst.msk [vmem:[%s3 + $0x8] sm:$0xff] %vm2028, %v1995
    %2031 = vst.msk [vmem:[%s3 + $0x10] sm:$0xff] %vm2028, %v2000
    %2032 = vst.msk [vmem:[%s3 + $0x18] sm:$0xff] %vm2028, %v2005
    %2033 = vst.msk [vmem:[%s3 + $0x20] sm:$0xff] %vm2028, %v2010
    %2034 = vst.msk [vmem:[%s3 + $0x28] sm:$0xff] %vm2028, %v2015
    %2035 = vst.msk [vmem:[%s3 + $0x30] sm:$0xff] %vm2028, %v2020
    %2036 = vst.msk [vmem:[%s3 + $0x38] sm:$0xff] %vm2028, %v2025
    // Predicated region
    $region18: #{_lambda_.1} parent=1 // pred_check
      _
    $region19: #{_lambda_.1} parent=1 // pred_check_branch
      %2038 = sbr.rel (0) target = $region21
    $region20: #{_lambda_.1} parent=1 // pred_region
      _
    $region21: #{_lambda_.1} parent=1 // pred_fallthru
      _
    // Predicated region
    $region22: #{_lambda_.1} parent=1 // pred_check
      _
    $region23: #{_lambda_.1} parent=1 // pred_check_branch
      %2040 = sbr.rel (0) target = $region25
    $region24: #{_lambda_.1} parent=1 // pred_region
      _
    $region25: #{_lambda_.1} parent=1 // pred_fallthru
      _
    %2041 = vsyncpa [#allocation4], 1

</llo_original>
